<compile_context>
chip_gen: v7x
topology: tpu7x:2x2x1
jax: 0.10.0
libtpu: 0.0.40
codegen_flags: <defaults>
</compile_context>

<pallas_src>
import functools

import jax
import jax.numpy as jnp
from jax import lax
from jax.experimental import pallas as pl
from jax.experimental.pallas import tpu as pltpu

LANE = 128


def _round_up(x, m):
    return (x + m - 1) // m * m


def _pick_node_tile(n_pad):
    """Largest multiple of 128 that divides n_pad, capped at 512."""
    for t in (512, 384, 256, 128):
        if t <= n_pad and n_pad % t == 0:
            return t
    return n_pad


def build_normalized_adjacency_t(edge_index, num_nodes, n_pad):
    """Dense Ahat^T, Ahat = D^-1/2 (A + I_remaining) D^-1/2 (PyG gcn_norm:
    self-loops added only to nodes without one; degree over targets).  Built
    directly at the padded size (padded rows/cols stay exactly zero) and
    returned transposed so node tiles are lane-contiguous in the kernel."""
    src, dst = edge_index[0], edge_index[1]
    # a_t[src, dst] = A[dst, src]  (A[i, j] = weight of message j -> i)
    a_t = jnp.zeros((n_pad, n_pad), jnp.float32).at[src, dst].add(1.0)
    idx = jnp.arange(num_nodes)
    diag = a_t[idx, idx]
    a_t = a_t.at[idx, idx].set(jnp.where(diag > 0.0, diag, 1.0))
    deg = a_t.sum(axis=0)                     # in-degree (over targets)
    dinv = jnp.where(deg > 0.0, 1.0 / jnp.sqrt(deg), 0.0)
    return (dinv[:, None] * a_t * dinv[None, :]).astype(jnp.bfloat16)


# ----------------------------- Pallas kernel -------------------------------
def _fused_gcn_kernel(
    adjT_hbm,    # [n_tiles, n_pad, tile_n] bf16 HBM (pl.ANY): chunked Ahat^T
    xT_hbm,      # [f_pad, n_pad]           bf16 HBM (pl.ANY): X^T
    w_ref,       # [1, f_pad, f_pad]        bf16 VMEM: W_l^T
    b_ref,       # [1, f_pad, 1]            f32  VMEM: b_l
    o_ref,       # [f_pad, n_pad]           f32  VMEM: out^T (written layer 5)
    adj_vmem,    # [n_tiles, n_pad, tile_n] bf16 scratch: resident Ahat^T
    h_ref,       # [f_pad, n_pad]           bf16 scratch: H_l^T
    t_ref,       # [f_pad, n_pad]           bf16 scratch: (H_l W_l)^T
    sem,         # DMA semaphores (2,)
    *,
    n_layers,
    n_tiles,
    tile_n,
):
    """One grid step == one GCN layer:  H_{l+1}^T = relu(W_l^T H_l^T Ahat^T + b_l)."""
    l = pl.program_id(0)
    last = l == n_layers - 1

    def adj_chunk(c, slot):
        return pltpu.make_async_copy(adjT_hbm.at[c], adj_vmem.at[c], sem.at[slot])

    # Layer 0: kick off the Ahat^T stream and seed H_0^T = X^T (tiny copy).
    @pl.when(l == 0)
    def _():
        adj_chunk(0, 0).start()
        xcp = pltpu.make_async_copy(xT_hbm, h_ref, sem.at[1])
        xcp.start()
        xcp.wait()

    # Feature transform (small matmul, overlaps chunk-0 DMA on layer 0).
    t_ref[...] = jnp.dot(
        w_ref[0], h_ref[...], preferred_element_type=jnp.float32
    ).astype(jnp.bfloat16)

    bias = b_ref[0]                                  # [f_pad, 1] f32

    # Aggregation, tiled over node columns: keeps the f32 temporary to one
    # [f_pad, tile_n] tile and gives the MXU a wide output on v6e/v7x.
    def tile_body(c, carry):
        @pl.when(l == 0)
        def _():
            adj_chunk(c, c % 2).wait()               # this chunk has landed

            @pl.when(c + 1 < n_tiles)
            def _():
                adj_chunk(c + 1, (c + 1) % 2).start()  # prefetch next chunk

        out_t = jnp.dot(
            t_ref[...], adj_vmem[c], preferred_element_type=jnp.float32
        ) + bias                                     # [f_pad, tile_n] f32

        col = pl.multiple_of(c * tile_n, tile_n)
        # relu feeds the next layer (padded feature rows stay zero; padded
        # node columns hold relu(b) but never feed a real node).
        h_ref[:, pl.ds(col, tile_n)] = jnp.maximum(out_t, 0.0).astype(jnp.bfloat16)

        # upconv5: final output, no relu.
        @pl.when(last)
        def _():
            o_ref[:, pl.ds(col, tile_n)] = out_t.astype(o_ref.dtype)

        return carry

    lax.fori_loop(0, n_tiles, tile_body, 0)


# ------------------------------ glue (JAX) ---------------------------------
def init_upconv_params(hidden_feats, channels_out, key):
    """GCNConv parameters (glorot-uniform W, zero bias) for the five layers."""
    dims = [
        hidden_feats // 16,
        hidden_feats // 8,
        hidden_feats // 4,
        hidden_feats // 2,
        hidden_feats,
        channels_out,
    ]
    params = []
    for i in range(5):
        f_in, f_out = dims[i], dims[i + 1]
        key, wkey = jax.random.split(key)
        limit = jnp.sqrt(6.0 / (f_in + f_out))
        w = jax.random.uniform(
            wkey, (f_in, f_out), jnp.float32, minval=-limit, maxval=limit
        )
        b = jnp.zeros((1, f_out), jnp.float32)
        params.append((w, b))
    return params


def upconv_layers_forward(x, edge_index, params):
    """Pallas implementation of UpConvLayers.forward.

    x:          [N, hidden_feats // 16] float32 node features
    edge_index: [2, E] int32 COO edge list
    """
    num_nodes, f_in0 = x.shape
    n_layers = len(params)
    channels_out = params[-1][0].shape[1]

    f_dims = [f_in0] + [w.shape[1] for w, _ in params]
    f_pad = max(LANE, _round_up(max(f_dims), LANE))
    n_pad = max(LANE, _round_up(num_nodes, LANE))
    tile_n = _pick_node_tile(n_pad)
    n_tiles = n_pad // tile_n

    # Generation-aware VMEM budget (v5e/v6e: 128 MiB, v7x: 64 MiB).
    try:
        vmem_cap = int(pltpu.get_tpu_info().vmem_capacity_bytes)
    except Exception:
        vmem_cap = 64 * 1024 * 1024          # conservative (v7x) fallback
    vmem_limit = int(vmem_cap * 0.85)

    # Rough resident-VMEM estimate for the dense-Ahat fast path.
    est = 2 * n_pad * n_pad                          # Ahat^T scratch (bf16)
    est += 2 * 2 * f_pad * n_pad                     # H^T + T^T scratch (bf16)
    est += 4 * f_pad * n_pad                         # out^T block (f32)
    est += 2 * 2 * (f_pad * f_pad * 2 + f_pad * 4)   # W^T / b double-buffered
    est += 8 * f_pad * tile_n * 4                    # in-flight f32 tile temps
    if est > vmem_limit:
        # TODO(synk): row-tiled / sparse (CSR + scalar-prefetch) fallback for
        # graphs whose dense Ahat does not fit VMEM (needed at scale on v7x).
        raise ValueError(
            f"dense-Ahat fast path needs ~{est >> 20} MiB VMEM but only "
            f"{vmem_limit >> 20} MiB is available on this TPU generation")

    # Padded, transposed, bf16 operands.
    ahat_t = build_normalized_adjacency_t(edge_index, num_nodes, n_pad)
    # Pre-chunk Ahat^T along the node-column axis so every streamed DMA is a
    # fully contiguous [n_pad, tile_n] block.
    adj_chunks = ahat_t.reshape(n_pad, n_tiles, tile_n).transpose(1, 0, 2)

    xT = jnp.zeros((f_pad, n_pad), jnp.bfloat16)
    xT = xT.at[:f_in0, :num_nodes].set(x.T.astype(jnp.bfloat16))

    wT_stack = jnp.zeros((n_layers, f_pad, f_pad), jnp.bfloat16)
    b_stack = jnp.zeros((n_layers, f_pad, 1), jnp.float32)
    for i, (w, b) in enumerate(params):
        fi, fo = w.shape
        wT_stack = wT_stack.at[i, :fo, :fi].set(w.T.astype(jnp.bfloat16))
        b_stack = b_stack.at[i, :fo, 0].set(b.reshape(-1).astype(jnp.float32))

    kern = functools.partial(
        _fused_gcn_kernel, n_layers=n_layers, n_tiles=n_tiles, tile_n=tile_n)

    def _pallas(out_spec):
        return pl.pallas_call(
            kern,
            out_shape=jax.ShapeDtypeStruct((f_pad, n_pad), jnp.float32),
            grid_spec=pltpu.PrefetchScalarGridSpec(
                num_scalar_prefetch=0,
                grid=(n_layers,),
                in_specs=[
                    pl.BlockSpec(memory_space=pl.ANY),   # Ahat^T chunks (HBM)
                    pl.BlockSpec(memory_space=pl.ANY),   # X^T (HBM, copied once)
                    pl.BlockSpec((1, f_pad, f_pad), lambda l: (l, 0, 0)),  # W_l^T
                    pl.BlockSpec((1, f_pad, 1), lambda l: (l, 0, 0)),      # b_l
                ],
                out_specs=out_spec,
                scratch_shapes=[
                    pltpu.VMEM((n_tiles, n_pad, tile_n), jnp.bfloat16),  # Ahat^T
                    pltpu.VMEM((f_pad, n_pad), jnp.bfloat16),            # H_l^T
                    pltpu.VMEM((f_pad, n_pad), jnp.bfloat16),            # (H_l W_l)^T
                    pltpu.SemaphoreType.DMA((2,)),
                ],
            ),
            compiler_params=pltpu.CompilerParams(
                dimension_semantics=("arbitrary",),      # layer axis is sequential
                vmem_limit_bytes=vmem_limit,
            ),
        )(adj_chunks, xT, wT_stack, b_stack)

    try:
        # Output block index is constant across the layer grid -> a second
        # pipeline buffer would never be used; request single buffering.
        out_t_pad = _pallas(pl.BlockSpec((f_pad, n_pad), lambda l: (0, 0),
                                         pipeline_mode=pl.Buffered(1)))
    except Exception:
        # Fallback if this build rejects pipeline_mode on pallas_call specs
        # (costs one extra f_pad x n_pad f32 output buffer, nothing else).
        out_t_pad = _pallas(pl.BlockSpec((f_pad, n_pad), lambda l: (0, 0)))

    # TODO(synk): on v7x, split node tiles across the 2 TensorCores
    # (core_map / CORE_PARALLEL with H^T in VMEM_SHARED) for up to ~2x.
    return out_t_pad[:channels_out, :num_nodes].T


# ------------------------------ reference ----------------------------------
def reference_forward(x, edge_index, params):
    """Pure-JAX f32 dense reference mirroring PyG GCNConv + UpConvLayers."""
    n = x.shape[0]
    src, dst = edge_index[0], edge_index[1]
    adj = jnp.zeros((n, n), jnp.float32).at[dst, src].add(1.0)
    idx = jnp.arange(n)
    diag = adj[idx, idx]
    adj = adj.at[idx, idx].set(jnp.where(diag > 0.0, diag, 1.0))
    deg = adj.sum(axis=1)
    dinv = jnp.where(deg > 0.0, 1.0 / jnp.sqrt(deg), 0.0)
    ahat = dinv[:, None] * adj * dinv[None, :]
    h = x
    for i, (w, b) in enumerate(params):
        h = ahat @ h @ w + b
        if i < len(params) - 1:
            h = jnp.maximum(h, 0.0)
    return h


# --------------------------------- main -------------------------------------
if __name__ == "__main__":
    HIDDEN_FEATS = 32
    CHANNELS_OUT = 4

    def run_case(key, num_nodes, num_edges):
        key, xk, ek1, ek2, pk = jax.random.split(key, 5)
        x = jax.random.normal(xk, (num_nodes, HIDDEN_FEATS // 16), jnp.float32)
        src = jax.random.randint(ek1, (num_edges,), 0, num_nodes, jnp.int32)
        dst = jax.random.randint(ek2, (num_edges,), 0, num_nodes, jnp.int32)
        edge_index = jnp.stack([src, dst], axis=0)
        params = init_upconv_params(HIDDEN_FEATS, CHANNELS_OUT, pk)

        out = upconv_layers_forward(x, edge_index, params)
        jax.block_until_ready(out)
        assert out.shape == (num_nodes, CHANNELS_OUT)

        ref = reference_forward(x, edge_index, params)
        err = float(jnp.max(jnp.abs(out - ref)))
        assert jnp.allclose(out, ref, rtol=5e-2, atol=5e-2), err
        return key

    key = jax.random.PRNGKey(0)
    key = run_case(key, num_nodes=16, num_edges=32)     # n_pad=128, single tile
    key = run_case(key, num_nodes=520, num_edges=2080)  # n_pad=640, 5 streamed tiles
    print("KERNEL_OK")
</pallas_src>

<mosaic_0001>
module attributes {stable_mosaic.version = 11 : i64} {
  func.func @_fused_gcn_kernel(%arg0: i32, %arg1: memref<1x128x128xbf16, #tpu.memory_space<any>>, %arg2: memref<128x128xbf16, #tpu.memory_space<any>>, %arg3: memref<1x128x128xbf16, #tpu.memory_space<vmem>>, %arg4: memref<1x128x1xf32, #tpu.memory_space<vmem>>, %arg5: memref<128x128xf32, #tpu.memory_space<vmem>>, %arg6: memref<1x128x128xbf16, #tpu.memory_space<vmem>>, %arg7: memref<128x128xbf16, #tpu.memory_space<vmem>>, %arg8: memref<128x128xbf16, #tpu.memory_space<vmem>>, %arg9: memref<2x!tpu.dma_semaphore, #tpu.memory_space<semaphore_mem>>) attributes {dimension_semantics = [#tpu.dimension_semantics<arbitrary>], iteration_bounds = array<i64: 5>, scalar_prefetch = 0 : i64, scratch_operands = 4 : i64, tpu.core_type = #tpu.core_type<tc>, window_params = [{}, {}, {transform_indices = @transform_2, window_bounds = array<i64: 1, 128, 128>}, {transform_indices = @transform_3, window_bounds = array<i64: 1, 128, 1>}, {pipeline_mode = #tpu.pipeline_mode<synchronous>, transform_indices = @transform_4, window_bounds = array<i64: 128, 128>}]} {
    %c4_i32 = arith.constant 4 : i32
    %0 = arith.cmpi eq, %arg0, %c4_i32 : i32
    %c0_i32 = arith.constant 0 : i32
    %1 = arith.cmpi eq, %arg0, %c0_i32 : i32
    %2 = arith.extui %1 : i1 to i32
    %c0_i32_0 = arith.constant 0 : i32
    %3 = arith.cmpi ne, %2, %c0_i32_0 : i32
    scf.if %3 {
      %c0_i32_21 = arith.constant 0 : i32
      %c0_i32_22 = arith.constant 0 : i32
      %c0_i32_23 = arith.constant 0 : i32
      %c0_i32_24 = arith.constant 0 : i32
      %c0_i32_25 = arith.constant 0 : i32
      %31 = tpu.memref_slice %arg1[%c0_i32_21, %c0_i32_24, %c0_i32_25] : memref<1x128x128xbf16, #tpu.memory_space<any>> -> memref<1x128x128xbf16, #tpu.memory_space<any>>
      %32 = tpu.memref_squeeze %31 : memref<1x128x128xbf16, #tpu.memory_space<any>> -> memref<128x128xbf16, #tpu.memory_space<any>>
      %c0_i32_26 = arith.constant 0 : i32
      %c0_i32_27 = arith.constant 0 : i32
      %33 = tpu.memref_slice %arg6[%c0_i32_22, %c0_i32_26, %c0_i32_27] : memref<1x128x128xbf16, #tpu.memory_space<vmem>> -> memref<1x128x128xbf16, #tpu.memory_space<vmem>>
      %34 = tpu.memref_squeeze %33 : memref<1x128x128xbf16, #tpu.memory_space<vmem>> -> memref<128x128xbf16, #tpu.memory_space<vmem>>
      %35 = tpu.memref_slice %arg9[%c0_i32_23] : memref<2x!tpu.dma_semaphore, #tpu.memory_space<semaphore_mem>> -> memref<1x!tpu.dma_semaphore, #tpu.memory_space<semaphore_mem>>
      %36 = tpu.memref_squeeze %35 : memref<1x!tpu.dma_semaphore, #tpu.memory_space<semaphore_mem>> -> memref<!tpu.dma_semaphore, #tpu.memory_space<semaphore_mem>>
      tpu.enqueue_dma source(%32 : memref<128x128xbf16, #tpu.memory_space<any>>) target(%34 : memref<128x128xbf16, #tpu.memory_space<vmem>>) target_semaphore(%36 : memref<!tpu.dma_semaphore, #tpu.memory_space<semaphore_mem>>)
      %c1_i32_28 = arith.constant 1 : i32
      %37 = tpu.memref_slice %arg9[%c1_i32_28] : memref<2x!tpu.dma_semaphore, #tpu.memory_space<semaphore_mem>> -> memref<1x!tpu.dma_semaphore, #tpu.memory_space<semaphore_mem>>
      %38 = tpu.memref_squeeze %37 : memref<1x!tpu.dma_semaphore, #tpu.memory_space<semaphore_mem>> -> memref<!tpu.dma_semaphore, #tpu.memory_space<semaphore_mem>>
      tpu.enqueue_dma source(%arg2 : memref<128x128xbf16, #tpu.memory_space<any>>) target(%arg7 : memref<128x128xbf16, #tpu.memory_space<vmem>>) target_semaphore(%38 : memref<!tpu.dma_semaphore, #tpu.memory_space<semaphore_mem>>)
      %c1_i32_29 = arith.constant 1 : i32
      %39 = tpu.memref_slice %arg9[%c1_i32_29] : memref<2x!tpu.dma_semaphore, #tpu.memory_space<semaphore_mem>> -> memref<1x!tpu.dma_semaphore, #tpu.memory_space<semaphore_mem>>
      %40 = tpu.memref_squeeze %39 : memref<1x!tpu.dma_semaphore, #tpu.memory_space<semaphore_mem>> -> memref<!tpu.dma_semaphore, #tpu.memory_space<semaphore_mem>>
      tpu.wait_dma2 semaphore(%40 : memref<!tpu.dma_semaphore, #tpu.memory_space<semaphore_mem>>) src(%arg2 : memref<128x128xbf16, #tpu.memory_space<any>>) dst(%arg7 : memref<128x128xbf16, #tpu.memory_space<vmem>>)
    } else {
    }
    %c0 = arith.constant 0 : index
    %c0_1 = arith.constant 0 : index
    %c0_2 = arith.constant 0 : index
    %4 = vector.load %arg3[%c0, %c0_1, %c0_2] : memref<1x128x128xbf16, #tpu.memory_space<vmem>>, vector<1x128x128xbf16>
    %5 = vector.shape_cast %4 : vector<1x128x128xbf16> to vector<128x128xbf16>
    %c0_3 = arith.constant 0 : index
    %c0_4 = arith.constant 0 : index
    %6 = vector.load %arg7[%c0_3, %c0_4] : memref<128x128xbf16, #tpu.memory_space<vmem>>, vector<128x128xbf16>
    %cst = arith.constant dense<0.000000e+00> : vector<128x128xf32>
    %7 = tpu.matmul %5, %6, %cst {dimension_numbers = #tpu.dot_dimension_numbers<[1], [0], [0], [1], [0, 0, 1, 1], [], []>} : vector<128x128xbf16>, vector<128x128xbf16>, vector<128x128xf32> -> vector<128x128xf32>
    %8 = arith.truncf %7 : vector<128x128xf32> to vector<128x128xbf16>
    %c0_5 = arith.constant 0 : index
    %c0_6 = arith.constant 0 : index
    %9 = vector.load %arg8[%c0_5, %c0_6] : memref<128x128xbf16, #tpu.memory_space<vmem>>, vector<128x128xbf16>
    tpu.vector_store %arg8[%c0_5, %c0_6], %8 {strides = array<i32>} : memref<128x128xbf16, #tpu.memory_space<vmem>>, vector<128x128xbf16>,
    %c0_7 = arith.constant 0 : index
    %c0_8 = arith.constant 0 : index
    %c0_9 = arith.constant 0 : index
    %10 = vector.load %arg4[%c0_7, %c0_8, %c0_9] : memref<1x128x1xf32, #tpu.memory_space<vmem>>, vector<1x128x1xf32>
    %11 = vector.shape_cast %10 : vector<1x128x1xf32> to vector<128x1xf32>
    %c0_i32_10 = arith.constant 0 : i32
    %c0_i32_11 = arith.constant 0 : i32
    %12 = arith.cmpi eq, %arg0, %c0_i32_11 : i32
    %13 = arith.extui %12 : i1 to i32
    %c0_i32_12 = arith.constant 0 : i32
    %14 = arith.cmpi ne, %13, %c0_i32_12 : i32
    scf.if %14 {
      %c2_i32 = arith.constant 2 : i32
      %c0_i32_21 = arith.constant 0 : i32
      %31 = arith.cmpi eq, %c2_i32, %c0_i32_21 : i32
      %c1_i32_22 = arith.constant 1 : i32
      %32 = arith.select %31, %c1_i32_22, %c2_i32 : i32
      %33 = arith.remsi %c0_i32_10, %32 : i32
      %c0_i32_23 = arith.constant 0 : i32
      %34 = arith.cmpi ne, %33, %c0_i32_23 : i32
      %c0_i32_24 = arith.constant 0 : i32
      %35 = arith.cmpi slt, %33, %c0_i32_24 : i32
      %c0_i32_25 = arith.constant 0 : i32
      %36 = arith.cmpi slt, %32, %c0_i32_25 : i32
      %37 = arith.xori %35, %36 : i1
      %38 = arith.andi %37, %34 : i1
      %39 = arith.addi %33, %32 : i32
      %40 = arith.select %38, %39, %33 : i32
      %c0_i32_26 = arith.constant 0 : i32
      %c0_i32_27 = arith.constant 0 : i32
      %41 = tpu.memref_slice %arg1[%c0_i32_10, %c0_i32_26, %c0_i32_27] : memref<1x128x128xbf16, #tpu.memory_space<any>> -> memref<1x128x128xbf16, #tpu.memory_space<any>>
      %42 = tpu.memref_squeeze %41 : memref<1x128x128xbf16, #tpu.memory_space<any>> -> memref<128x128xbf16, #tpu.memory_space<any>>
      %c0_i32_28 = arith.constant 0 : i32
      %c0_i32_29 = arith.constant 0 : i32
      %43 = tpu.memref_slice %arg6[%c0_i32_10, %c0_i32_28, %c0_i32_29] : memref<1x128x128xbf16, #tpu.memory_space<vmem>> -> memref<1x128x128xbf16, #tpu.memory_space<vmem>>
      %44 = tpu.memref_squeeze %43 : memref<1x128x128xbf16, #tpu.memory_space<vmem>> -> memref<128x128xbf16, #tpu.memory_space<vmem>>
      %45 = tpu.memref_slice %arg9[%40] : memref<2x!tpu.dma_semaphore, #tpu.memory_space<semaphore_mem>> -> memref<1x!tpu.dma_semaphore, #tpu.memory_space<semaphore_mem>>
      %46 = tpu.memref_squeeze %45 : memref<1x!tpu.dma_semaphore, #tpu.memory_space<semaphore_mem>> -> memref<!tpu.dma_semaphore, #tpu.memory_space<semaphore_mem>>
      tpu.wait_dma2 semaphore(%46 : memref<!tpu.dma_semaphore, #tpu.memory_space<semaphore_mem>>) src(%42 : memref<128x128xbf16, #tpu.memory_space<any>>) dst(%44 : memref<128x128xbf16, #tpu.memory_space<vmem>>)
      %c1_i32_30 = arith.constant 1 : i32
      %47 = arith.addi %c0_i32_10, %c1_i32_30 : i32
      %c1_i32_31 = arith.constant 1 : i32
      %48 = arith.cmpi slt, %47, %c1_i32_31 : i32
      %49 = arith.extui %48 : i1 to i32
      %c0_i32_32 = arith.constant 0 : i32
      %50 = arith.cmpi ne, %49, %c0_i32_32 : i32
      scf.if %50 {
        %c1_i32_33 = arith.constant 1 : i32
        %51 = arith.addi %c0_i32_10, %c1_i32_33 : i32
        %c1_i32_34 = arith.constant 1 : i32
        %52 = arith.addi %c0_i32_10, %c1_i32_34 : i32
        %c2_i32_35 = arith.constant 2 : i32
        %c0_i32_36 = arith.constant 0 : i32
        %53 = arith.cmpi eq, %c2_i32_35, %c0_i32_36 : i32
        %c1_i32_37 = arith.constant 1 : i32
        %54 = arith.select %53, %c1_i32_37, %c2_i32_35 : i32
        %55 = arith.remsi %52, %54 : i32
        %c0_i32_38 = arith.constant 0 : i32
        %56 = arith.cmpi ne, %55, %c0_i32_38 : i32
        %c0_i32_39 = arith.constant 0 : i32
        %57 = arith.cmpi slt, %55, %c0_i32_39 : i32
        %c0_i32_40 = arith.constant 0 : i32
        %58 = arith.cmpi slt, %54, %c0_i32_40 : i32
        %59 = arith.xori %57, %58 : i1
        %60 = arith.andi %59, %56 : i1
        %61 = arith.addi %55, %54 : i32
        %62 = arith.select %60, %61, %55 : i32
        %c0_i32_41 = arith.constant 0 : i32
        %c0_i32_42 = arith.constant 0 : i32
        %63 = tpu.memref_slice %arg1[%51, %c0_i32_41, %c0_i32_42] : memref<1x128x128xbf16, #tpu.memory_space<any>> -> memref<1x128x128xbf16, #tpu.memory_space<any>>
        %64 = tpu.memref_squeeze %63 : memref<1x128x128xbf16, #tpu.memory_space<any>> -> memref<128x128xbf16, #tpu.memory_space<any>>
        %c0_i32_43 = arith.constant 0 : i32
        %c0_i32_44 = arith.constant 0 : i32
        %65 = tpu.memref_slice %arg6[%51, %c0_i32_43, %c0_i32_44] : memref<1x128x128xbf16, #tpu.memory_space<vmem>> -> memref<1x128x128xbf16, #tpu.memory_space<vmem>>
        %66 = tpu.memref_squeeze %65 : memref<1x128x128xbf16, #tpu.memory_space<vmem>> -> memref<128x128xbf16, #tpu.memory_space<vmem>>
        %67 = tpu.memref_slice %arg9[%62] : memref<2x!tpu.dma_semaphore, #tpu.memory_space<semaphore_mem>> -> memref<1x!tpu.dma_semaphore, #tpu.memory_space<semaphore_mem>>
        %68 = tpu.memref_squeeze %67 : memref<1x!tpu.dma_semaphore, #tpu.memory_space<semaphore_mem>> -> memref<!tpu.dma_semaphore, #tpu.memory_space<semaphore_mem>>
        tpu.enqueue_dma source(%64 : memref<128x128xbf16, #tpu.memory_space<any>>) target(%66 : memref<128x128xbf16, #tpu.memory_space<vmem>>) target_semaphore(%68 : memref<!tpu.dma_semaphore, #tpu.memory_space<semaphore_mem>>)
      } else {
      }
    } else {
    }
    %c0_13 = arith.constant 0 : index
    %c0_14 = arith.constant 0 : index
    %15 = vector.load %arg8[%c0_13, %c0_14] : memref<128x128xbf16, #tpu.memory_space<vmem>>, vector<128x128xbf16>
    %16 = arith.index_cast %c0_i32_10 : i32 to index
    %c0_15 = arith.constant 0 : index
    %c0_16 = arith.constant 0 : index
    %17 = vector.load %arg6[%16, %c0_15, %c0_16] : memref<1x128x128xbf16, #tpu.memory_space<vmem>>, vector<1x128x128xbf16>
    %18 = vector.shape_cast %17 : vector<1x128x128xbf16> to vector<128x128xbf16>
    %cst_17 = arith.constant dense<0.000000e+00> : vector<128x128xf32>
    %19 = tpu.matmul %15, %18, %cst_17 {dimension_numbers = #tpu.dot_dimension_numbers<[1], [0], [0], [1], [0, 0, 1, 1], [], []>} : vector<128x128xbf16>, vector<128x128xbf16>, vector<128x128xf32> -> vector<128x128xf32>
    %20 = vector.broadcast %11 : vector<128x1xf32> to vector<128x128xf32>
    %21 = arith.addf %19, %20 : vector<128x128xf32>
    %c128_i32 = arith.constant 128 : i32
    %22 = arith.muli %c0_i32_10, %c128_i32 : i32
    %23 = tpu.assume_multiple %22, 128 : i32
    %cst_18 = arith.constant 0.000000e+00 : f32
    %24 = vector.broadcast %cst_18 : f32 to vector<128x128xf32>
    %25 = arith.maximumf %21, %24 : vector<128x128xf32>
    %26 = arith.truncf %25 : vector<128x128xf32> to vector<128x128xbf16>
    %c0_19 = arith.constant 0 : index
    %27 = arith.index_cast %23 : i32 to index
    %28 = vector.load %arg7[%c0_19, %27] : memref<128x128xbf16, #tpu.memory_space<vmem>>, vector<128x128xbf16>
    tpu.vector_store %arg7[%c0_19, %27], %26 {strides = array<i32>} : memref<128x128xbf16, #tpu.memory_space<vmem>>, vector<128x128xbf16>,
    %29 = arith.extui %0 : i1 to i32
    %c0_i32_20 = arith.constant 0 : i32
    %30 = arith.cmpi ne, %29, %c0_i32_20 : i32
    scf.if %30 {
      %c0_21 = arith.constant 0 : index
      %31 = arith.index_cast %23 : i32 to index
      %32 = vector.load %arg5[%c0_21, %31] : memref<128x128xf32, #tpu.memory_space<vmem>>, vector<128x128xf32>
      tpu.vector_store %arg5[%c0_21, %31], %21 {strides = array<i32>} : memref<128x128xf32, #tpu.memory_space<vmem>>, vector<128x128xf32>,
    } else {
    }
    %c1_i32 = arith.constant 1 : i32
    return
  }
  func.func @transform_2(%arg0: i32) -> (i32, i32, i32) {
    %c0_i32 = arith.constant 0 : i32
    %c0_i32_0 = arith.constant 0 : i32
    %c0_i32_1 = arith.constant 0 : i32
    return %arg0, %c0_i32, %c0_i32_0 : i32, i32, i32
  }
  func.func @transform_3(%arg0: i32) -> (i32, i32, i32) {
    %c0_i32 = arith.constant 0 : i32
    %c0_i32_0 = arith.constant 0 : i32
    %c0_i32_1 = arith.constant 0 : i32
    return %arg0, %c0_i32, %c0_i32_0 : i32, i32, i32
  }
  func.func @transform_4(%arg0: i32) -> (i32, i32) {
    %c0_i32 = arith.constant 0 : i32
    %c0_i32_0 = arith.constant 0 : i32
    %c0_i32_1 = arith.constant 0 : i32
    return %c0_i32, %c0_i32_0 : i32, i32
  }
}

module attributes {stable_mosaic.version = 11 : i64} {
  func.func @_fused_gcn_kernel(%arg0: i32, %arg1: memref<1x128x128xbf16, #tpu.memory_space<any>>, %arg2: memref<128x128xbf16, #tpu.memory_space<any>>, %arg3: memref<1x128x128xbf16, #tpu.memory_space<vmem>>, %arg4: memref<1x128x1xf32, #tpu.memory_space<vmem>>, %arg5: memref<128x128xf32, #tpu.memory_space<vmem>>, %arg6: memref<1x128x128xbf16, #tpu.memory_space<vmem>>, %arg7: memref<128x128xbf16, #tpu.memory_space<vmem>>, %arg8: memref<128x128xbf16, #tpu.memory_space<vmem>>, %arg9: memref<2x!tpu.dma_semaphore, #tpu.memory_space<semaphore_mem>>) attributes {dimension_semantics = [#tpu.dimension_semantics<arbitrary>], iteration_bounds = array<i64: 5>, scalar_prefetch = 0 : i64, scratch_operands = 4 : i64, tpu.core_type = #tpu.core_type<tc>, window_params = [{}, {}, {transform_indices = @transform_2, window_bounds = array<i64: 1, 128, 128>}, {transform_indices = @transform_3, window_bounds = array<i64: 1, 128, 1>}, {pipeline_mode = #tpu.pipeline_mode<synchronous>, transform_indices = @transform_4, window_bounds = array<i64: 128, 128>}]} {
    %c4_i32 = arith.constant 4 : i32
    %0 = arith.cmpi eq, %arg0, %c4_i32 : i32
    %c0_i32 = arith.constant 0 : i32
    %1 = arith.cmpi eq, %arg0, %c0_i32 : i32
    %2 = arith.extui %1 : i1 to i32
    %c0_i32_0 = arith.constant 0 : i32
    %3 = arith.cmpi ne, %2, %c0_i32_0 : i32
    scf.if %3 {
      %c0_i32_21 = arith.constant 0 : i32
      %c0_i32_22 = arith.constant 0 : i32
      %c0_i32_23 = arith.constant 0 : i32
      %c0_i32_24 = arith.constant 0 : i32
      %c0_i32_25 = arith.constant 0 : i32
      %31 = tpu.memref_slice %arg1[%c0_i32_21, %c0_i32_24, %c0_i32_25] : memref<1x128x128xbf16, #tpu.memory_space<any>> -> memref<1x128x128xbf16, #tpu.memory_space<any>>
      %32 = tpu.memref_squeeze %31 : memref<1x128x128xbf16, #tpu.memory_space<any>> -> memref<128x128xbf16, #tpu.memory_space<any>>
      %c0_i32_26 = arith.constant 0 : i32
      %c0_i32_27 = arith.constant 0 : i32
      %33 = tpu.memref_slice %arg6[%c0_i32_22, %c0_i32_26, %c0_i32_27] : memref<1x128x128xbf16, #tpu.memory_space<vmem>> -> memref<1x128x128xbf16, #tpu.memory_space<vmem>>
      %34 = tpu.memref_squeeze %33 : memref<1x128x128xbf16, #tpu.memory_space<vmem>> -> memref<128x128xbf16, #tpu.memory_space<vmem>>
      %35 = tpu.memref_slice %arg9[%c0_i32_23] : memref<2x!tpu.dma_semaphore, #tpu.memory_space<semaphore_mem>> -> memref<1x!tpu.dma_semaphore, #tpu.memory_space<semaphore_mem>>
      %36 = tpu.memref_squeeze %35 : memref<1x!tpu.dma_semaphore, #tpu.memory_space<semaphore_mem>> -> memref<!tpu.dma_semaphore, #tpu.memory_space<semaphore_mem>>
      tpu.enqueue_dma source(%32 : memref<128x128xbf16, #tpu.memory_space<any>>) target(%34 : memref<128x128xbf16, #tpu.memory_space<vmem>>) target_semaphore(%36 : memref<!tpu.dma_semaphore, #tpu.memory_space<semaphore_mem>>)
      %c1_i32_28 = arith.constant 1 : i32
      %37 = tpu.memref_slice %arg9[%c1_i32_28] : memref<2x!tpu.dma_semaphore, #tpu.memory_space<semaphore_mem>> -> memref<1x!tpu.dma_semaphore, #tpu.memory_space<semaphore_mem>>
      %38 = tpu.memref_squeeze %37 : memref<1x!tpu.dma_semaphore, #tpu.memory_space<semaphore_mem>> -> memref<!tpu.dma_semaphore, #tpu.memory_space<semaphore_mem>>
      tpu.enqueue_dma source(%arg2 : memref<128x128xbf16, #tpu.memory_space<any>>) target(%arg7 : memref<128x128xbf16, #tpu.memory_space<vmem>>) target_semaphore(%38 : memref<!tpu.dma_semaphore, #tpu.memory_space<semaphore_mem>>)
      %c1_i32_29 = arith.constant 1 : i32
      %39 = tpu.memref_slice %arg9[%c1_i32_29] : memref<2x!tpu.dma_semaphore, #tpu.memory_space<semaphore_mem>> -> memref<1x!tpu.dma_semaphore, #tpu.memory_space<semaphore_mem>>
      %40 = tpu.memref_squeeze %39 : memref<1x!tpu.dma_semaphore, #tpu.memory_space<semaphore_mem>> -> memref<!tpu.dma_semaphore, #tpu.memory_space<semaphore_mem>>
      tpu.wait_dma2 semaphore(%40 : memref<!tpu.dma_semaphore, #tpu.memory_space<semaphore_mem>>) src(%arg2 : memref<128x128xbf16, #tpu.memory_space<any>>) dst(%arg7 : memref<128x128xbf16, #tpu.memory_space<vmem>>)
    } else {
    }
    %c0 = arith.constant 0 : index
    %c0_1 = arith.constant 0 : index
    %c0_2 = arith.constant 0 : index
    %4 = vector.load %arg3[%c0, %c0_1, %c0_2] : memref<1x128x128xbf16, #tpu.memory_space<vmem>>, vector<1x128x128xbf16>
    %5 = vector.shape_cast %4 : vector<1x128x128xbf16> to vector<128x128xbf16>
    %c0_3 = arith.constant 0 : index
    %c0_4 = arith.constant 0 : index
    %6 = vector.load %arg7[%c0_3, %c0_4] : memref<128x128xbf16, #tpu.memory_space<vmem>>, vector<128x128xbf16>
    %cst = arith.constant dense<0.000000e+00> : vector<128x128xf32>
    %7 = tpu.matmul %5, %6, %cst {dimension_numbers = #tpu.dot_dimension_numbers<[1], [0], [0], [1], [0, 0, 1, 1], [], []>} : vector<128x128xbf16>, vector<128x128xbf16>, vector<128x128xf32> -> vector<128x128xf32>
    %8 = arith.truncf %7 : vector<128x128xf32> to vector<128x128xbf16>
    %c0_5 = arith.constant 0 : index
    %c0_6 = arith.constant 0 : index
    %9 = vector.load %arg8[%c0_5, %c0_6] : memref<128x128xbf16, #tpu.memory_space<vmem>>, vector<128x128xbf16>
    tpu.vector_store %arg8[%c0_5, %c0_6], %8 {strides = array<i32>} : memref<128x128xbf16, #tpu.memory_space<vmem>>, vector<128x128xbf16>,
    %c0_7 = arith.constant 0 : index
    %c0_8 = arith.constant 0 : index
    %c0_9 = arith.constant 0 : index
    %10 = vector.load %arg4[%c0_7, %c0_8, %c0_9] : memref<1x128x1xf32, #tpu.memory_space<vmem>>, vector<1x128x1xf32>
    %11 = vector.shape_cast %10 : vector<1x128x1xf32> to vector<128x1xf32>
    %c0_i32_10 = arith.constant 0 : i32
    %c0_i32_11 = arith.constant 0 : i32
    %12 = arith.cmpi eq, %arg0, %c0_i32_11 : i32
    %13 = arith.extui %12 : i1 to i32
    %c0_i32_12 = arith.constant 0 : i32
    %14 = arith.cmpi ne, %13, %c0_i32_12 : i32
    scf.if %14 {
      %c2_i32 = arith.constant 2 : i32
      %c0_i32_21 = arith.constant 0 : i32
      %31 = arith.cmpi eq, %c2_i32, %c0_i32_21 : i32
      %c1_i32_22 = arith.constant 1 : i32
      %32 = arith.select %31, %c1_i32_22, %c2_i32 : i32
      %33 = arith.remsi %c0_i32_10, %32 : i32
      %c0_i32_23 = arith.constant 0 : i32
      %34 = arith.cmpi ne, %33, %c0_i32_23 : i32
      %c0_i32_24 = arith.constant 0 : i32
      %35 = arith.cmpi slt, %33, %c0_i32_24 : i32
      %c0_i32_25 = arith.constant 0 : i32
      %36 = arith.cmpi slt, %32, %c0_i32_25 : i32
      %37 = arith.xori %35, %36 : i1
      %38 = arith.andi %37, %34 : i1
      %39 = arith.addi %33, %32 : i32
      %40 = arith.select %38, %39, %33 : i32
      %c0_i32_26 = arith.constant 0 : i32
      %c0_i32_27 = arith.constant 0 : i32
      %41 = tpu.memref_slice %arg1[%c0_i32_10, %c0_i32_26, %c0_i32_27] : memref<1x128x128xbf16, #tpu.memory_space<any>> -> memref<1x128x128xbf16, #tpu.memory_space<any>>
      %42 = tpu.memref_squeeze %41 : memref<1x128x128xbf16, #tpu.memory_space<any>> -> memref<128x128xbf16, #tpu.memory_space<any>>
      %c0_i32_28 = arith.constant 0 : i32
      %c0_i32_29 = arith.constant 0 : i32
      %43 = tpu.memref_slice %arg6[%c0_i32_10, %c0_i32_28, %c0_i32_29] : memref<1x128x128xbf16, #tpu.memory_space<vmem>> -> memref<1x128x128xbf16, #tpu.memory_space<vmem>>
      %44 = tpu.memref_squeeze %43 : memref<1x128x128xbf16, #tpu.memory_space<vmem>> -> memref<128x128xbf16, #tpu.memory_space<vmem>>
      %45 = tpu.memref_slice %arg9[%40] : memref<2x!tpu.dma_semaphore, #tpu.memory_space<semaphore_mem>> -> memref<1x!tpu.dma_semaphore, #tpu.memory_space<semaphore_mem>>
      %46 = tpu.memref_squeeze %45 : memref<1x!tpu.dma_semaphore, #tpu.memory_space<semaphore_mem>> -> memref<!tpu.dma_semaphore, #tpu.memory_space<semaphore_mem>>
      tpu.wait_dma2 semaphore(%46 : memref<!tpu.dma_semaphore, #tpu.memory_space<semaphore_mem>>) src(%42 : memref<128x128xbf16, #tpu.memory_space<any>>) dst(%44 : memref<128x128xbf16, #tpu.memory_space<vmem>>)
      %c1_i32_30 = arith.constant 1 : i32
      %47 = arith.addi %c0_i32_10, %c1_i32_30 : i32
      %c1_i32_31 = arith.constant 1 : i32
      %48 = arith.cmpi slt, %47, %c1_i32_31 : i32
      %49 = arith.extui %48 : i1 to i32
      %c0_i32_32 = arith.constant 0 : i32
      %50 = arith.cmpi ne, %49, %c0_i32_32 : i32
      scf.if %50 {
        %c1_i32_33 = arith.constant 1 : i32
        %51 = arith.addi %c0_i32_10, %c1_i32_33 : i32
        %c1_i32_34 = arith.constant 1 : i32
        %52 = arith.addi %c0_i32_10, %c1_i32_34 : i32
        %c2_i32_35 = arith.constant 2 : i32
        %c0_i32_36 = arith.constant 0 : i32
        %53 = arith.cmpi eq, %c2_i32_35, %c0_i32_36 : i32
        %c1_i32_37 = arith.constant 1 : i32
        %54 = arith.select %53, %c1_i32_37, %c2_i32_35 : i32
        %55 = arith.remsi %52, %54 : i32
        %c0_i32_38 = arith.constant 0 : i32
        %56 = arith.cmpi ne, %55, %c0_i32_38 : i32
        %c0_i32_39 = arith.constant 0 : i32
        %57 = arith.cmpi slt, %55, %c0_i32_39 : i32
        %c0_i32_40 = arith.constant 0 : i32
        %58 = arith.cmpi slt, %54, %c0_i32_40 : i32
        %59 = arith.xori %57, %58 : i1
        %60 = arith.andi %59, %56 : i1
        %61 = arith.addi %55, %54 : i32
        %62 = arith.select %60, %61, %55 : i32
        %c0_i32_41 = arith.constant 0 : i32
        %c0_i32_42 = arith.constant 0 : i32
        %63 = tpu.memref_slice %arg1[%51, %c0_i32_41, %c0_i32_42] : memref<1x128x128xbf16, #tpu.memory_space<any>> -> memref<1x128x128xbf16, #tpu.memory_space<any>>
        %64 = tpu.memref_squeeze %63 : memref<1x128x128xbf16, #tpu.memory_space<any>> -> memref<128x128xbf16, #tpu.memory_space<any>>
        %c0_i32_43 = arith.constant 0 : i32
        %c0_i32_44 = arith.constant 0 : i32
        %65 = tpu.memref_slice %arg6[%51, %c0_i32_43, %c0_i32_44] : memref<1x128x128xbf16, #tpu.memory_space<vmem>> -> memref<1x128x128xbf16, #tpu.memory_space<vmem>>
        %66 = tpu.memref_squeeze %65 : memref<1x128x128xbf16, #tpu.memory_space<vmem>> -> memref<128x128xbf16, #tpu.memory_space<vmem>>
        %67 = tpu.memref_slice %arg9[%62] : memref<2x!tpu.dma_semaphore, #tpu.memory_space<semaphore_mem>> -> memref<1x!tpu.dma_semaphore, #tpu.memory_space<semaphore_mem>>
        %68 = tpu.memref_squeeze %67 : memref<1x!tpu.dma_semaphore, #tpu.memory_space<semaphore_mem>> -> memref<!tpu.dma_semaphore, #tpu.memory_space<semaphore_mem>>
        tpu.enqueue_dma source(%64 : memref<128x128xbf16, #tpu.memory_space<any>>) target(%66 : memref<128x128xbf16, #tpu.memory_space<vmem>>) target_semaphore(%68 : memref<!tpu.dma_semaphore, #tpu.memory_space<semaphore_mem>>)
      } else {
      }
    } else {
    }
    %c0_13 = arith.constant 0 : index
    %c0_14 = arith.constant 0 : index
    %15 = vector.load %arg8[%c0_13, %c0_14] : memref<128x128xbf16, #tpu.memory_space<vmem>>, vector<128x128xbf16>
    %16 = arith.index_cast %c0_i32_10 : i32 to index
    %c0_15 = arith.constant 0 : index
    %c0_16 = arith.constant 0 : index
    %17 = vector.load %arg6[%16, %c0_15, %c0_16] : memref<1x128x128xbf16, #tpu.memory_space<vmem>>, vector<1x128x128xbf16>
    %18 = vector.shape_cast %17 : vector<1x128x128xbf16> to vector<128x128xbf16>
    %cst_17 = arith.constant dense<0.000000e+00> : vector<128x128xf32>
    %19 = tpu.matmul %15, %18, %cst_17 {dimension_numbers = #tpu.dot_dimension_numbers<[1], [0], [0], [1], [0, 0, 1, 1], [], []>} : vector<128x128xbf16>, vector<128x128xbf16>, vector<128x128xf32> -> vector<128x128xf32>
    %20 = vector.broadcast %11 : vector<128x1xf32> to vector<128x128xf32>
    %21 = arith.addf %19, %20 : vector<128x128xf32>
    %c128_i32 = arith.constant 128 : i32
    %22 = arith.muli %c0_i32_10, %c128_i32 : i32
    %23 = tpu.assume_multiple %22, 128 : i32
    %cst_18 = arith.constant 0.000000e+00 : f32
    %24 = vector.broadcast %cst_18 : f32 to vector<128x128xf32>
    %25 = arith.maximumf %21, %24 : vector<128x128xf32>
    %26 = arith.truncf %25 : vector<128x128xf32> to vector<128x128xbf16>
    %c0_19 = arith.constant 0 : index
    %27 = arith.index_cast %23 : i32 to index
    %28 = vector.load %arg7[%c0_19, %27] : memref<128x128xbf16, #tpu.memory_space<vmem>>, vector<128x128xbf16>
    tpu.vector_store %arg7[%c0_19, %27], %26 {strides = array<i32>} : memref<128x128xbf16, #tpu.memory_space<vmem>>, vector<128x128xbf16>,
    %29 = arith.extui %0 : i1 to i32
    %c0_i32_20 = arith.constant 0 : i32
    %30 = arith.cmpi ne, %29, %c0_i32_20 : i32
    scf.if %30 {
      %c0_21 = arith.constant 0 : index
      %31 = arith.index_cast %23 : i32 to index
      %32 = vector.load %arg5[%c0_21, %31] : memref<128x128xf32, #tpu.memory_space<vmem>>, vector<128x128xf32>
      tpu.vector_store %arg5[%c0_21, %31], %21 {strides = array<i32>} : memref<128x128xf32, #tpu.memory_space<vmem>>, vector<128x128xf32>,
    } else {
    }
    %c1_i32 = arith.constant 1 : i32
    return
  }
  func.func @transform_2(%arg0: i32) -> (i32, i32, i32) {
    %c0_i32 = arith.constant 0 : i32
    %c0_i32_0 = arith.constant 0 : i32
    %c0_i32_1 = arith.constant 0 : i32
    return %arg0, %c0_i32, %c0_i32_0 : i32, i32, i32
  }
  func.func @transform_3(%arg0: i32) -> (i32, i32, i32) {
    %c0_i32 = arith.constant 0 : i32
    %c0_i32_0 = arith.constant 0 : i32
    %c0_i32_1 = arith.constant 0 : i32
    return %arg0, %c0_i32, %c0_i32_0 : i32, i32, i32
  }
  func.func @transform_4(%arg0: i32) -> (i32, i32) {
    %c0_i32 = arith.constant 0 : i32
    %c0_i32_0 = arith.constant 0 : i32
    %c0_i32_1 = arith.constant 0 : i32
    return %c0_i32, %c0_i32_0 : i32, i32
  }
}

</mosaic_0001>

<llo_original>
// kernel: tpu_custom_call.1
$region0: #{tpu_custom_call.1}
  #allocation0 [shape = 'u32[]', space=smem, size = 0x4, offset = 0x4, fixed_abs, tag = 'smem constant byte address 0x4 - core index']
  #allocation1 [shape = 'u32[144,128]{1,0:T(1,128)}', space=vmem, size = 0x12000, scoped, tag = 'internal scratch']
  #allocation2 [shape = 'bf16[1,128,128]{2,1,0:T(16,128)(2,1)}', space=vmem, size = 0x8000, scoped, tag = 'scratch operand']
  #allocation3 [shape = 'bf16[128,128]{1,0:T(16,128)(2,1)}', space=vmem, size = 0x8000, scoped, tag = 'scratch operand']
  #allocation4 [shape = 'bf16[128,128]{1,0:T(16,128)(2,1)}', space=vmem, size = 0x8000, scoped, tag = 'scratch operand']
  #allocation5 [shape = 's32[2]{0}', space=sflag, size = 0x8, scoped, tag = 'scratch operand']
  #allocation8 [shape = 's32[]', space=sflag, size = 0x4, offset = 0, fixed_abs, tag = 'sflag constant byte address 0x0 - dummy sync flag']
  #allocation9 [shape = 's32[]', space=sflag, size = 0x4, offset = 0, fixed_abs, tag = 'sflag constant byte address 0x0 - dummy sync flag']
  %s0 = inlined_call_operand.vmem [shape: bf16[1,128,128], index: 0, kind: input, shape index: {}]
  %s1 = inlined_call_operand.vmem [shape: bf16[128,128], index: 1, kind: input, shape index: {}]
  %s2 = inlined_call_operand.vmem [shape: bf16[5,128,128], index: 2, kind: input, shape index: {}]
  %s3 = inlined_call_operand.vmem [shape: f32[5,128,1], index: 3, kind: input, shape index: {}]
  %s4 = inlined_call_operand.hbm [shape: f32[128,128], index: 4, kind: output, shape index: {}]
  %s5 = sld [smem:[#allocation0]]
  $region121: #{tpu_custom_call.1} parent=0
    _
  %s7 = ssub.s32 1, %s5
  %s8 = scalar_select 0, %s7, %s5
  $region1: #{tpu_custom_call.1} parent=0
    #allocation6 [shape = 'u8[65536]{0}', space=vmem, size = 0x10000, scoped, tag = 'output window, operand 0, single buffered']
    #allocation7 [shape = 's32[2]{0}', space=sflag, size = 0x8, scoped, tag = 'scoped memory for tpu_custom_call.1']
    %9 = vsyncpa [#allocation7], 0
    loop: start=0, step=1, limit=7
    $region2: #{tpu_custom_call.1} parent=1 // loop_pre_header
      _
    $region3: #{tpu_custom_call.1} parent=1 // loop_header
      %s11 = sphi 0, %s15
      %p12 = scmp.ge.s32.totalorder %s11, 7
      %s21 = sphi 0, %s23
      %s24 = sphi 0, %s21
      %s25 = sphi 0, %s24
      %s41 = sphi 0, %s25
      %s47 = sphi 0, %s49
      %s50 = sphi 0, %s47
      %s51 = sphi 0, %s50
      %s67 = sphi 0, %s51
      %s71 = sphi 0, %s71
      %s73 = sphi 0, %s71
      %s74 = sphi 0, %s73
      %s88 = sphi 0, %s74
    $region4: #{tpu_custom_call.1} parent=1 // loop_header_branch
      %14 = sbr.rel (%p12) target = $region8
    $region5: #{tpu_custom_call.1} parent=1 // loop_body
      %s16 = ssub.s32 %s11, 1
      %s17 = ssub.s32 %s11, 2
      %s18 = sadd.s32 %s11, 1
      %s19 = ssub.s32 %s11, %s18
      %p20 = scmp.eq.s32.totalorder %s19, 0
      %s22 = sadd.s32 %s21, 1
      %s23 = scalar_select %p20, %s21, %s22
      %p26 = pneg %p20
      %p27 = scmp.eq.s32.totalorder %s11, 4
      %p28 = por %p26, %p27
      %p29 = scmp.ne.s32.totalorder %s21, %s24
      %p30 = scmp.eq.s32.totalorder %s11, 0
      %p31 = por %p29, %p30
      %p32 = scmp.ne.s32.totalorder %s21, %s24
      %p33 = scmp.eq.s32.totalorder %s16, 4
      %p34 = por %p32, %p33
      %p35 = scmp.ne.s32.totalorder %s24, %s25
      %p36 = scmp.eq.s32.totalorder %s16, 0
      %p37 = por %p35, %p36
      %p38 = scmp.ne.s32.totalorder %s24, %s25
      %p39 = scmp.eq.s32.totalorder %s17, 4
      %p40 = por %p38, %p39
      %p42 = scmp.ne.s32.totalorder %s25, %s41
      %p43 = scmp.eq.s32.totalorder %s17, 0
      %p44 = por %p42, %p43
      %s45 = ssub.s32 %s11, %s18
      %p46 = scmp.eq.s32.totalorder %s45, 0
      %s48 = sadd.s32 %s47, 1
      %s49 = scalar_select %p46, %s47, %s48
      %p52 = pneg %p46
      %p53 = scmp.eq.s32.totalorder %s11, 4
      %p54 = por %p52, %p53
      %p55 = scmp.ne.s32.totalorder %s47, %s50
      %p56 = scmp.eq.s32.totalorder %s11, 0
      %p57 = por %p55, %p56
      %p58 = scmp.ne.s32.totalorder %s47, %s50
      %p59 = scmp.eq.s32.totalorder %s16, 4
      %p60 = por %p58, %p59
      %p61 = scmp.ne.s32.totalorder %s50, %s51
      %p62 = scmp.eq.s32.totalorder %s16, 0
      %p63 = por %p61, %p62
      %p64 = scmp.ne.s32.totalorder %s50, %s51
      %p65 = scmp.eq.s32.totalorder %s17, 4
      %p66 = por %p64, %p65
      %p68 = scmp.ne.s32.totalorder %s51, %s67
      %p69 = scmp.eq.s32.totalorder %s17, 0
      %p70 = por %p68, %p69
      %s72 = sadd.s32 %s71, 1
      %p75 = scmp.eq.s32.totalorder %s11, 4
      %p76 = scmp.ne.s32.totalorder %s71, %s73
      %p77 = scmp.eq.s32.totalorder %s11, 0
      %p78 = por %p76, %p77
      %p79 = scmp.ne.s32.totalorder %s71, %s73
      %p80 = scmp.eq.s32.totalorder %s16, 4
      %p81 = por %p79, %p80
      %p82 = scmp.ne.s32.totalorder %s73, %s74
      %p83 = scmp.eq.s32.totalorder %s16, 0
      %p84 = por %p82, %p83
      %p85 = scmp.ne.s32.totalorder %s73, %s74
      %p86 = scmp.eq.s32.totalorder %s17, 4
      %p87 = por %p85, %p86
      %p89 = scmp.ne.s32.totalorder %s74, %s88
      %p90 = scmp.eq.s32.totalorder %s17, 0
      %p91 = por %p89, %p90
      %p92 = scmp.le.s32.totalorder 1, %s11
      %p93 = scmp.lt.s32.totalorder %s11, 6
      %p94 = pnand %p92, %p93
      %p95 = pneg %p94
      // Predicated region
      $region9: #{tpu_custom_call.1} parent=5 // pred_check
        _
      $region10: #{tpu_custom_call.1} parent=5 // pred_check_branch
        %97 = sbr.rel (%p94) target = $region12
      $region11: #{tpu_custom_call.1} parent=5 // pred_region
        %s98 = ssub.s32 %s11, 1
      $region12: #{tpu_custom_call.1} parent=5 // pred_fallthru
        _
      %p99 = scmp.lt.s32.totalorder %s11, 5
      // Predicated region
      $region13: #{tpu_custom_call.1} parent=5 // pred_check
        %p100 = pneg %p99
      $region14: #{tpu_custom_call.1} parent=5 // pred_check_branch
        %102 = sbr.rel (%p100) target = $region16
      $region15: #{tpu_custom_call.1} parent=5 // pred_region
        // Predicated region
        $region17: #{tpu_custom_call.1} parent=15 // pred_check
          %p103 = pneg %p31
        $region18: #{tpu_custom_call.1} parent=15 // pred_check_branch
          %105 = sbr.rel (%p103) target = $region20
        $region19: #{tpu_custom_call.1} parent=15 // pred_region
          %p106 = scmp.lt.s32.totalorder %s11, 4
          %s107 = scalar_select %p106, %s11, 4
          %s108 = smul.addr %s107, 16
          %s109 = smul.addr %s108, 4
          %s110 = scalar_lea.vmem %s2, %s109
        $region20: #{tpu_custom_call.1} parent=15 // pred_fallthru
          _
        // Predicated region
        $region21: #{tpu_custom_call.1} parent=15 // pred_check
          %p111 = pneg %p57
        $region22: #{tpu_custom_call.1} parent=15 // pred_check_branch
          %113 = sbr.rel (%p111) target = $region24
        $region23: #{tpu_custom_call.1} parent=15 // pred_region
          %p114 = scmp.lt.s32.totalorder %s11, 4
          %s115 = scalar_select %p114, %s11, 4
          %s116 = smul.addr %s115, 16
          %s117 = smul.addr %s116, 8
          %s118 = scalar_lea.vmem %s3, %s117
        $region24: #{tpu_custom_call.1} parent=15 // pred_fallthru
          _
      $region16: #{tpu_custom_call.1} parent=5 // pred_fallthru
        _
      %p119 = scmp.le.s32.totalorder 1, %s11
      %p120 = scmp.lt.s32.totalorder %s11, 6
      %p121 = pnand %p119, %p120
      %p122 = pneg %p121
      // Predicated region
      $region25: #{tpu_custom_call.1} parent=5 // pred_check
        _
      $region26: #{tpu_custom_call.1} parent=5 // pred_check_branch
        %124 = sbr.rel (%p121) target = $region28
      $region27: #{tpu_custom_call.1} parent=5 // pred_region
        %s125 = ssub.s32 %s11, 1
        %p126 = scmp.lt.s32.totalorder %s16, 4
        %s127 = scalar_select %p126, %s16, 4
        %s128 = smul.addr %s127, 16
        %s129 = smul.addr %s128, 4
        %s130 = scalar_lea.vmem %s2, %s129
        %p131 = pneg %p37
        %p132 = pneg %p34
        %p133 = scmp.lt.s32.totalorder %s16, 4
        %s134 = scalar_select %p133, %s16, 4
        %s135 = smul.addr %s134, 16
        %s136 = smul.addr %s135, 8
        %s137 = scalar_lea.vmem %s3, %s136
        %p138 = pneg %p63
        %p139 = pneg %p60
        %p140 = pneg %p84
        %p141 = pneg %p81
        %p142 = scmp.lt.s32.totalorder %s16, 4
        %s143 = scalar_select %p142, %s16, 4
        %s144 = smul.addr %s143, 16
        %s145 = smul.addr %s144, 4
        %s146 = scalar_lea.vmem %s2, %s145
        %p147 = scmp.lt.s32.totalorder %s16, 4
        %s148 = scalar_select %p147, %s16, 4
        %s149 = smul.addr %s148, 16
        %s150 = smul.addr %s149, 8
        %s151 = scalar_lea.vmem %s3, %s150
        %p153 = scmp.eq.s32.totalorder %s16, 4
        %p154 = scmp.eq.s32.totalorder %s16, 0
        // Predicated region
        $region29: #{tpu_custom_call.1} parent=27 // pred_check
          %p155 = pneg %p154
        $region30: #{tpu_custom_call.1} parent=27 // pred_check_branch
          %157 = sbr.rel (%p155) target = $region32
        $region31: #{tpu_custom_call.1} parent=27 // pred_region
          %p159 = scmp.lt.u32.totalorder 64, 8
          %p160 = pneg %p159
          // Predicated region
          $region33: #{tpu_custom_call.1} parent=31 // pred_check
            _
          $region34: #{tpu_custom_call.1} parent=31 // pred_check_branch
            %162 = sbr.rel (%p159) target = $region36
          $region35: #{tpu_custom_call.1} parent=31 // pred_region
            %s177 = sand.u32 64, 7
            %p178 = scmp.eq.s32.totalorder %s177, 0
            // Predicated region
            $region48: #{tpu_custom_call.1} parent=35 // pred_check
              %p179 = pneg %p178
            $region49: #{tpu_custom_call.1} parent=35 // pred_check_branch
              %181 = sbr.rel (%p179) target = $region51
            $region50: #{tpu_custom_call.1} parent=35 // pred_region
              loop: start=0, step=1, limit=1
              $region52: #{tpu_custom_call.1} parent=50 // loop_pre_header
                _
              $region53: #{tpu_custom_call.1} parent=50 // loop_header
                %s183 = sphi 0, %s187
                %p184 = scmp.ge.s32.totalorder %s183, 1
                %s188 = sphi %s0, %s0
                %s189 = sphi [#allocation2], [#allocation2]
              $region54: #{tpu_custom_call.1} parent=50 // loop_header_branch
                %186 = sbr.rel (%p184) target = $region58
              $region55: #{tpu_custom_call.1} parent=50 // loop_body
                %v190 = vld [vmem:[%s188] sm:$0xff]
                %191 = vst [vmem:[%s189] sm:$0xff] %v190
                %v192 = vld [vmem:[%s188 + $0x8] sm:$0xff]
                %193 = vst [vmem:[%s189 + $0x8] sm:$0xff] %v192
                %v194 = vld [vmem:[%s188 + $0x10] sm:$0xff]
                %195 = vst [vmem:[%s189 + $0x10] sm:$0xff] %v194
                %v196 = vld [vmem:[%s188 + $0x18] sm:$0xff]
                %197 = vst [vmem:[%s189 + $0x18] sm:$0xff] %v196
                %v198 = vld [vmem:[%s188 + $0x20] sm:$0xff]
                %199 = vst [vmem:[%s189 + $0x20] sm:$0xff] %v198
                %v200 = vld [vmem:[%s188 + $0x28] sm:$0xff]
                %201 = vst [vmem:[%s189 + $0x28] sm:$0xff] %v200
                %v202 = vld [vmem:[%s188 + $0x30] sm:$0xff]
                %203 = vst [vmem:[%s189 + $0x30] sm:$0xff] %v202
                %v204 = vld [vmem:[%s188 + $0x38] sm:$0xff]
                %205 = vst [vmem:[%s189 + $0x38] sm:$0xff] %v204
              $region56: #{tpu_custom_call.1} parent=50 // loop_footer
                %s187 = sadd.s32 1, %s183
              $region57: #{tpu_custom_call.1} parent=50 // loop_footer_branch
                %182 = sbr.rel target = $region53
              $region58: #{tpu_custom_call.1} parent=50 // loop_exit
                _
            $region51: #{tpu_custom_call.1} parent=35 // pred_fallthru
              _
            %p206 = pneg %p178
            // Predicated region
            $region59: #{tpu_custom_call.1} parent=35 // pred_check
              _
            $region60: #{tpu_custom_call.1} parent=35 // pred_check_branch
              %208 = sbr.rel (%p178) target = $region62
            $region61: #{tpu_custom_call.1} parent=35 // pred_region
              %s209 = sand.u32 64, 7
            $region62: #{tpu_custom_call.1} parent=35 // pred_fallthru
              _
          $region36: #{tpu_custom_call.1} parent=31 // pred_fallthru
            _
          // Predicated region
          $region37: #{tpu_custom_call.1} parent=31 // pred_check
            %p163 = pneg %p159
          $region38: #{tpu_custom_call.1} parent=31 // pred_check_branch
            %165 = sbr.rel (%p163) target = $region40
          $region39: #{tpu_custom_call.1} parent=31 // pred_region
            %s166 = sshllo.u32 0, 64
            loop: start=0, step=1, limit=1
            $region41: #{tpu_custom_call.1} parent=39 // loop_pre_header
              _
            $region42: #{tpu_custom_call.1} parent=39 // loop_header
              %s168 = sphi 0, %s172
              %p169 = scmp.ge.s32.totalorder %s168, 1
              %s173 = sphi %s0, %s0
              %s174 = sphi [#allocation2], [#allocation2]
            $region43: #{tpu_custom_call.1} parent=39 // loop_header_branch
              %171 = sbr.rel (%p169) target = $region47
            $region44: #{tpu_custom_call.1} parent=39 // loop_body
              %v175 = vld [vmem:[%s173] sm:%s166]
              %176 = vst [vmem:[%s174] sm:%s166] %v175
            $region45: #{tpu_custom_call.1} parent=39 // loop_footer
              %s172 = sadd.s32 1, %s168
            $region46: #{tpu_custom_call.1} parent=39 // loop_footer_branch
              %167 = sbr.rel target = $region42
            $region47: #{tpu_custom_call.1} parent=39 // loop_exit
              _
          $region40: #{tpu_custom_call.1} parent=31 // pred_fallthru
            _
          // Predicated region
          $region63: #{tpu_custom_call.1} parent=31 // pred_check
            _
          $region64: #{tpu_custom_call.1} parent=31 // pred_check_branch
            %212 = sbr.rel (0) target = $region66
          $region65: #{tpu_custom_call.1} parent=31 // pred_region
            %213 = vsyncadd [#allocation5], 1024
          $region66: #{tpu_custom_call.1} parent=31 // pred_fallthru
            _
          %s214 = scalar_lea.sflag [#allocation5], 1
          %p216 = scmp.lt.u32.totalorder 64, 8
          %p217 = pneg %p216
          // Predicated region
          $region67: #{tpu_custom_call.1} parent=31 // pred_check
            _
          $region68: #{tpu_custom_call.1} parent=31 // pred_check_branch
            %219 = sbr.rel (%p216) target = $region70
          $region69: #{tpu_custom_call.1} parent=31 // pred_region
            %s234 = sand.u32 64, 7
            %p235 = scmp.eq.s32.totalorder %s234, 0
            // Predicated region
            $region82: #{tpu_custom_call.1} parent=69 // pred_check
              %p236 = pneg %p235
            $region83: #{tpu_custom_call.1} parent=69 // pred_check_branch
              %238 = sbr.rel (%p236) target = $region85
            $region84: #{tpu_custom_call.1} parent=69 // pred_region
              loop: start=0, step=1, limit=1
              $region86: #{tpu_custom_call.1} parent=84 // loop_pre_header
                _
              $region87: #{tpu_custom_call.1} parent=84 // loop_header
                %s240 = sphi 0, %s244
                %p241 = scmp.ge.s32.totalorder %s240, 1
                %s245 = sphi %s1, %s1
                %s246 = sphi [#allocation3], [#allocation3]
              $region88: #{tpu_custom_call.1} parent=84 // loop_header_branch
                %243 = sbr.rel (%p241) target = $region92
              $region89: #{tpu_custom_call.1} parent=84 // loop_body
                %v247 = vld [vmem:[%s245] sm:$0xff]
                %248 = vst [vmem:[%s246] sm:$0xff] %v247
                %v249 = vld [vmem:[%s245 + $0x8] sm:$0xff]
                %250 = vst [vmem:[%s246 + $0x8] sm:$0xff] %v249
                %v251 = vld [vmem:[%s245 + $0x10] sm:$0xff]
                %252 = vst [vmem:[%s246 + $0x10] sm:$0xff] %v251
                %v253 = vld [vmem:[%s245 + $0x18] sm:$0xff]
                %254 = vst [vmem:[%s246 + $0x18] sm:$0xff] %v253
                %v255 = vld [vmem:[%s245 + $0x20] sm:$0xff]
                %256 = vst [vmem:[%s246 + $0x20] sm:$0xff] %v255
                %v257 = vld [vmem:[%s245 + $0x28] sm:$0xff]
                %258 = vst [vmem:[%s246 + $0x28] sm:$0xff] %v257
                %v259 = vld [vmem:[%s245 + $0x30] sm:$0xff]
                %260 = vst [vmem:[%s246 + $0x30] sm:$0xff] %v259
                %v261 = vld [vmem:[%s245 + $0x38] sm:$0xff]
                %262 = vst [vmem:[%s246 + $0x38] sm:$0xff] %v261
              $region90: #{tpu_custom_call.1} parent=84 // loop_footer
                %s244 = sadd.s32 1, %s240
              $region91: #{tpu_custom_call.1} parent=84 // loop_footer_branch
                %239 = sbr.rel target = $region87
              $region92: #{tpu_custom_call.1} parent=84 // loop_exit
                _
            $region85: #{tpu_custom_call.1} parent=69 // pred_fallthru
              _
            %p263 = pneg %p235
            // Predicated region
            $region93: #{tpu_custom_call.1} parent=69 // pred_check
              _
            $region94: #{tpu_custom_call.1} parent=69 // pred_check_branch
              %265 = sbr.rel (%p235) target = $region96
            $region95: #{tpu_custom_call.1} parent=69 // pred_region
              %s266 = sand.u32 64, 7
            $region96: #{tpu_custom_call.1} parent=69 // pred_fallthru
              _
          $region70: #{tpu_custom_call.1} parent=31 // pred_fallthru
            _
          // Predicated region
          $region71: #{tpu_custom_call.1} parent=31 // pred_check
            %p220 = pneg %p216
          $region72: #{tpu_custom_call.1} parent=31 // pred_check_branch
            %222 = sbr.rel (%p220) target = $region74
          $region73: #{tpu_custom_call.1} parent=31 // pred_region
            %s223 = sshllo.u32 0, 64
            loop: start=0, step=1, limit=1
            $region75: #{tpu_custom_call.1} parent=73 // loop_pre_header
              _
            $region76: #{tpu_custom_call.1} parent=73 // loop_header
              %s225 = sphi 0, %s229
              %p226 = scmp.ge.s32.totalorder %s225, 1
              %s230 = sphi %s1, %s1
              %s231 = sphi [#allocation3], [#allocation3]
            $region77: #{tpu_custom_call.1} parent=73 // loop_header_branch
              %228 = sbr.rel (%p226) target = $region81
            $region78: #{tpu_custom_call.1} parent=73 // loop_body
              %v232 = vld [vmem:[%s230] sm:%s223]
              %233 = vst [vmem:[%s231] sm:%s223] %v232
            $region79: #{tpu_custom_call.1} parent=73 // loop_footer
              %s229 = sadd.s32 1, %s225
            $region80: #{tpu_custom_call.1} parent=73 // loop_footer_branch
              %224 = sbr.rel target = $region76
            $region81: #{tpu_custom_call.1} parent=73 // loop_exit
              _
          $region74: #{tpu_custom_call.1} parent=31 // pred_fallthru
            _
          // Predicated region
          $region97: #{tpu_custom_call.1} parent=31 // pred_check
            _
          $region98: #{tpu_custom_call.1} parent=31 // pred_check_branch
            %269 = sbr.rel (0) target = $region100
          $region99: #{tpu_custom_call.1} parent=31 // pred_region
            %270 = vsyncadd %s214, 1024
          $region100: #{tpu_custom_call.1} parent=31 // pred_fallthru
            _
          %s271 = smul.u32 4, 16
          %s272 = smul.u32 %s271, 1
          %s273 = sshll.u32 %s272, 4
          %274 = dma.done %s214, %s273
        $region32: #{tpu_custom_call.1} parent=27 // pred_fallthru
          _
        %v275 = vld [vmem:[%s146] sm:$0xf]
        %v276 = vld [vmem:[%s146 + $0x4] sm:$0xf]
        %v277 = vld [vmem:[%s146 + $0x8] sm:$0xf]
        %v278 = vld [vmem:[%s146 + $0xc] sm:$0xf]
        %v279 = vld [vmem:[%s146 + $0x10] sm:$0xf]
        %v280 = vld [vmem:[%s146 + $0x14] sm:$0xf]
        %v281 = vld [vmem:[%s146 + $0x18] sm:$0xf]
        %v282 = vld [vmem:[%s146 + $0x1c] sm:$0xf]
        %v283 = vld [vmem:[%s146 + $0x20] sm:$0xf]
        %v284 = vld [vmem:[%s146 + $0x24] sm:$0xf]
        %v285 = vld [vmem:[%s146 + $0x28] sm:$0xf]
        %v286 = vld [vmem:[%s146 + $0x2c] sm:$0xf]
        %v287 = vld [vmem:[%s146 + $0x30] sm:$0xf]
        %v288 = vld [vmem:[%s146 + $0x34] sm:$0xf]
        %v289 = vld [vmem:[%s146 + $0x38] sm:$0xf]
        %v290 = vld [vmem:[%s146 + $0x3c] sm:$0xf]
        %v291 = vld [vmem:[#allocation3] sm:$0xff]
        %v292 = vld [vmem:[#allocation3 + $0x8] sm:$0xff]
        %v293 = vld [vmem:[#allocation3 + $0x10] sm:$0xff]
        %v294 = vld [vmem:[#allocation3 + $0x18] sm:$0xff]
        %v295 = vld [vmem:[#allocation3 + $0x20] sm:$0xff]
        %v296 = vld [vmem:[#allocation3 + $0x28] sm:$0xff]
        %v297 = vld [vmem:[#allocation3 + $0x30] sm:$0xff]
        %v298 = vld [vmem:[#allocation3 + $0x38] sm:$0xff]
        %v315 = vunpack.c.l.b16 %v275
        %v316 = vunpack.c.l.b16 %v276
        %v317 = vunpack.c.l.b16 %v277
        %v318 = vunpack.c.l.b16 %v278
        %v319 = vunpack.c.l.b16 %v279
        %v320 = vunpack.c.l.b16 %v280
        %v321 = vunpack.c.l.b16 %v281
        %v322 = vunpack.c.l.b16 %v282
        %v323 = vunpack.c.l.b16 %v283
        %v324 = vunpack.c.l.b16 %v284
        %v325 = vunpack.c.l.b16 %v285
        %v326 = vunpack.c.l.b16 %v286
        %v327 = vunpack.c.l.b16 %v287
        %v328 = vunpack.c.l.b16 %v288
        %v329 = vunpack.c.l.b16 %v289
        %v330 = vunpack.c.l.b16 %v290
        %v331 = vpack.c.b16 %v316, %v315
        %v332 = vpack.c.b16 %v318, %v317
        %v333 = vpack.c.b16 %v320, %v319
        %v334 = vpack.c.b16 %v322, %v321
        %v335 = vpack.c.b16 %v324, %v323
        %v336 = vpack.c.b16 %v326, %v325
        %v337 = vpack.c.b16 %v328, %v327
        %v338 = vpack.c.b16 %v330, %v329
        %347 = vmatprep.subr.bf16.mxu0 0
        %348 = vmatpush1.bf16.msra.mxu0 %v291
        %349 = vmatprep.subr.bf16.mxu0 0
        %350 = vmatpush1.bf16.msra.mxu0 %v292
        %351 = vmatprep.subr.bf16.mxu0 0
        %352 = vmatpush1.bf16.msra.mxu0 %v293
        %353 = vmatprep.subr.bf16.mxu0 0
        %354 = vmatpush1.bf16.msra.mxu0 %v294
        %355 = vmatprep.subr.bf16.mxu0 0
        %356 = vmatpush1.bf16.msra.mxu0 %v295
        %357 = vmatprep.subr.bf16.mxu0 0
        %358 = vmatpush1.bf16.msra.mxu0 %v296
        %359 = vmatprep.subr.bf16.mxu0 0
        %360 = vmatpush1.bf16.msra.mxu0 %v297
        %361 = vmatprep.subr.bf16.mxu0 0
        %362 = vmatpush1.bf16.msra.mxu0 %v298
        %363 = vmatprep.subr.bf16.mxu0 0
        %364 = vmatpush1.bf16.msra.mxu0 0
        %365 = vmatprep.subr.bf16.mxu0 0
        %366 = vmatpush1.bf16.msra.mxu0 0
        %367 = vmatprep.subr.bf16.mxu0 0
        %368 = vmatpush1.bf16.msra.mxu0 0
        %369 = vmatprep.subr.bf16.mxu0 0
        %370 = vmatpush1.bf16.msra.mxu0 0
        %371 = vmatprep.subr.bf16.mxu0 0
        %372 = vmatpush1.bf16.msra.mxu0 0
        %373 = vmatprep.subr.bf16.mxu0 0
        %374 = vmatpush1.bf16.msra.mxu0 0
        %375 = vmatprep.subr.bf16.mxu0 0
        %376 = vmatpush1.bf16.msra.mxu0 0
        %377 = vmatprep.subr.bf16.mxu0 0
        %378 = vmatpush1.bf16.msra.mxu0 0
        %379 = vmatprep.mubr.bf16.mxu0 0
        %380 = vmatmul.mubr.bf16.gmra.mrb[0].mxu0 %v331
        %v381 = vpop.f32.mrb[0].mxu0
        %v382 = vadd.f32 0.0, %v381
        %v383 = vpop.f32.mrb[0].mxu0
        %v384 = vpop.f32.mrb[0].mxu0
        %v385 = vadd.f32 0.0, %v384
        %v386 = vpop.f32.mrb[0].mxu0
        %387 = vmatprep.mubr.bf16.mxu0 0
        %388 = vmatmul.mubr.bf16.gmra.mrb[0].mxu0 %v332
        %v389 = vpop.f32.mrb[0].mxu0
        %v390 = vadd.f32 0.0, %v389
        %v391 = vpop.f32.mrb[0].mxu0
        %v392 = vpop.f32.mrb[0].mxu0
        %v393 = vadd.f32 0.0, %v392
        %v394 = vpop.f32.mrb[0].mxu0
        %395 = vmatprep.mubr.bf16.mxu0 0
        %396 = vmatmul.mubr.bf16.gmra.mrb[0].mxu0 %v333
        %v397 = vpop.f32.mrb[0].mxu0
        %v398 = vadd.f32 0.0, %v397
        %v399 = vpop.f32.mrb[0].mxu0
        %v400 = vpop.f32.mrb[0].mxu0
        %v401 = vadd.f32 0.0, %v400
        %v402 = vpop.f32.mrb[0].mxu0
        %403 = vmatprep.mubr.bf16.mxu0 0
        %404 = vmatmul.mubr.bf16.gmra.mrb[0].mxu0 %v334
        %v405 = vpop.f32.mrb[0].mxu0
        %v406 = vadd.f32 0.0, %v405
        %v407 = vpop.f32.mrb[0].mxu0
        %v408 = vpop.f32.mrb[0].mxu0
        %v409 = vadd.f32 0.0, %v408
        %v410 = vpop.f32.mrb[0].mxu0
        %411 = vmatprep.mubr.bf16.mxu0 0
        %412 = vmatmul.mubr.bf16.gmra.mrb[0].mxu0 %v335
        %v413 = vpop.f32.mrb[0].mxu0
        %v414 = vadd.f32 0.0, %v413
        %v415 = vpop.f32.mrb[0].mxu0
        %v416 = vpop.f32.mrb[0].mxu0
        %v417 = vadd.f32 0.0, %v416
        %v418 = vpop.f32.mrb[0].mxu0
        %419 = vmatprep.mubr.bf16.mxu0 0
        %420 = vmatmul.mubr.bf16.gmra.mrb[0].mxu0 %v336
        %v421 = vpop.f32.mrb[0].mxu0
        %v422 = vadd.f32 0.0, %v421
        %v423 = vpop.f32.mrb[0].mxu0
        %v424 = vpop.f32.mrb[0].mxu0
        %v425 = vadd.f32 0.0, %v424
        %v426 = vpop.f32.mrb[0].mxu0
        %427 = vmatprep.mubr.bf16.mxu0 0
        %428 = vmatmul.mubr.bf16.gmra.mrb[0].mxu0 %v337
        %v429 = vpop.f32.mrb[0].mxu0
        %v430 = vadd.f32 0.0, %v429
        %v431 = vpop.f32.mrb[0].mxu0
        %v432 = vpop.f32.mrb[0].mxu0
        %v433 = vadd.f32 0.0, %v432
        %v434 = vpop.f32.mrb[0].mxu0
        %435 = vmatprep.mubr.bf16.mxu0 0
        %436 = vmatmul.mubr.bf16.gmra.mrb[0].mxu0 %v338
        %v437 = vpop.f32.mrb[0].mxu0
        %v438 = vadd.f32 0.0, %v437
        %v439 = vpop.f32.mrb[0].mxu0
        %v440 = vpop.f32.mrb[0].mxu0
        %v441 = vadd.f32 0.0, %v440
        %v442 = vpop.f32.mrb[0].mxu0
        %443 = vdwg.mxu0
        %v444 = vpack.c.bf16 %v385, %v382
        %v445 = vpack.c.bf16 %v393, %v390
        %v446 = vpack.c.bf16 %v401, %v398
        %v447 = vpack.c.bf16 %v409, %v406
        %v448 = vpack.c.bf16 %v417, %v414
        %v449 = vpack.c.bf16 %v425, %v422
        %v450 = vpack.c.bf16 %v433, %v430
        %v451 = vpack.c.bf16 %v441, %v438
        %452 = vst [vmem:[#allocation4] sm:$0xff] %v444
        %453 = vst [vmem:[#allocation4 + $0x8] sm:$0xff] %v445
        %454 = vst [vmem:[#allocation4 + $0x10] sm:$0xff] %v446
        %455 = vst [vmem:[#allocation4 + $0x18] sm:$0xff] %v447
        %456 = vst [vmem:[#allocation4 + $0x20] sm:$0xff] %v448
        %457 = vst [vmem:[#allocation4 + $0x28] sm:$0xff] %v449
        %458 = vst [vmem:[#allocation4 + $0x30] sm:$0xff] %v450
        %459 = vst [vmem:[#allocation4 + $0x38] sm:$0xff] %v451
        %v460 = vld [vmem:[%s151] sm:$0xff]
        %v461 = vld [vmem:[%s151 + $0x8] sm:$0xff]
        %v462 = vld [vmem:[%s151 + $0x10] sm:$0xff]
        %v463 = vld [vmem:[%s151 + $0x18] sm:$0xff]
        %v464 = vld [vmem:[%s151 + $0x20] sm:$0xff]
        %v465 = vld [vmem:[%s151 + $0x28] sm:$0xff]
        %v466 = vld [vmem:[%s151 + $0x30] sm:$0xff]
        %v467 = vld [vmem:[%s151 + $0x38] sm:$0xff]
        %v468 = vld [vmem:[%s151 + $0x40] sm:$0xff]
        %v469 = vld [vmem:[%s151 + $0x48] sm:$0xff]
        %v470 = vld [vmem:[%s151 + $0x50] sm:$0xff]
        %v471 = vld [vmem:[%s151 + $0x58] sm:$0xff]
        %v472 = vld [vmem:[%s151 + $0x60] sm:$0xff]
        %v473 = vld [vmem:[%s151 + $0x68] sm:$0xff]
        %v474 = vld [vmem:[%s151 + $0x70] sm:$0xff]
        %v475 = vld [vmem:[%s151 + $0x78] sm:$0xff]
        // Predicated region
        $region101: #{tpu_custom_call.1} parent=27 // pred_check
          %p476 = pneg %p154
        $region102: #{tpu_custom_call.1} parent=27 // pred_check_branch
          %478 = sbr.rel (%p476) target = $region104
        $region103: #{tpu_custom_call.1} parent=27 // pred_region
          %s479 = smul.u32 4, 16
          %s480 = smul.u32 %s479, 1
          %s481 = sshll.u32 %s480, 4
          %482 = dma.done [#allocation5], %s481
        $region104: #{tpu_custom_call.1} parent=27 // pred_fallthru
          _
        %v483 = vld [vmem:[#allocation4] sm:$0xff]
        %v484 = vld [vmem:[#allocation4 + $0x8] sm:$0xff]
        %v485 = vld [vmem:[#allocation4 + $0x10] sm:$0xff]
        %v486 = vld [vmem:[#allocation4 + $0x18] sm:$0xff]
        %v487 = vld [vmem:[#allocation4 + $0x20] sm:$0xff]
        %v488 = vld [vmem:[#allocation4 + $0x28] sm:$0xff]
        %v489 = vld [vmem:[#allocation4 + $0x30] sm:$0xff]
        %v490 = vld [vmem:[#allocation4 + $0x38] sm:$0xff]
        %v491 = vld [vmem:[#allocation2] sm:$0xff]
        %v492 = vld [vmem:[#allocation2 + $0x8] sm:$0xff]
        %v493 = vld [vmem:[#allocation2 + $0x10] sm:$0xff]
        %v494 = vld [vmem:[#allocation2 + $0x18] sm:$0xff]
        %v495 = vld [vmem:[#allocation2 + $0x20] sm:$0xff]
        %v496 = vld [vmem:[#allocation2 + $0x28] sm:$0xff]
        %v497 = vld [vmem:[#allocation2 + $0x30] sm:$0xff]
        %v498 = vld [vmem:[#allocation2 + $0x38] sm:$0xff]
        %500 = vset.pattern.permute.xlu0 0
        %501 = vperm.xlu0 %500, %v460
        %v502 = vpop.permute.xlu0 %501
        %505 = vset.pattern.permute.xlu0 0
        %506 = vperm.xlu0 %505, %v461
        %v507 = vpop.permute.xlu0 %506
        %510 = vset.pattern.permute.xlu0 0
        %511 = vperm.xlu0 %510, %v462
        %v512 = vpop.permute.xlu0 %511
        %515 = vset.pattern.permute.xlu0 0
        %516 = vperm.xlu0 %515, %v463
        %v517 = vpop.permute.xlu0 %516
        %520 = vset.pattern.permute.xlu0 0
        %521 = vperm.xlu0 %520, %v464
        %v522 = vpop.permute.xlu0 %521
        %525 = vset.pattern.permute.xlu0 0
        %526 = vperm.xlu0 %525, %v465
        %v527 = vpop.permute.xlu0 %526
        %530 = vset.pattern.permute.xlu0 0
        %531 = vperm.xlu0 %530, %v466
        %v532 = vpop.permute.xlu0 %531
        %535 = vset.pattern.permute.xlu0 0
        %536 = vperm.xlu0 %535, %v467
        %v537 = vpop.permute.xlu0 %536
        %540 = vset.pattern.permute.xlu0 0
        %541 = vperm.xlu0 %540, %v468
        %v542 = vpop.permute.xlu0 %541
        %545 = vset.pattern.permute.xlu0 0
        %546 = vperm.xlu0 %545, %v469
        %v547 = vpop.permute.xlu0 %546
        %550 = vset.pattern.permute.xlu0 0
        %551 = vperm.xlu0 %550, %v470
        %v552 = vpop.permute.xlu0 %551
        %555 = vset.pattern.permute.xlu0 0
        %556 = vperm.xlu0 %555, %v471
        %v557 = vpop.permute.xlu0 %556
        %560 = vset.pattern.permute.xlu0 0
        %561 = vperm.xlu0 %560, %v472
        %v562 = vpop.permute.xlu0 %561
        %565 = vset.pattern.permute.xlu0 0
        %566 = vperm.xlu0 %565, %v473
        %v567 = vpop.permute.xlu0 %566
        %570 = vset.pattern.permute.xlu0 0
        %571 = vperm.xlu0 %570, %v474
        %v572 = vpop.permute.xlu0 %571
        %575 = vset.pattern.permute.xlu0 0
        %576 = vperm.xlu0 %575, %v475
        %v577 = vpop.permute.xlu0 %576
        %579 = vmatprep.subr.bf16.mxu0 0
        %580 = vmatpush1.bf16.msra.mxu0 %v491
        %581 = vmatprep.subr.bf16.mxu0 0
        %582 = vmatpush1.bf16.msra.mxu0 %v492
        %583 = vmatprep.subr.bf16.mxu0 0
        %584 = vmatpush1.bf16.msra.mxu0 %v493
        %585 = vmatprep.subr.bf16.mxu0 0
        %586 = vmatpush1.bf16.msra.mxu0 %v494
        %587 = vmatprep.subr.bf16.mxu0 0
        %588 = vmatpush1.bf16.msra.mxu0 %v495
        %589 = vmatprep.subr.bf16.mxu0 0
        %590 = vmatpush1.bf16.msra.mxu0 %v496
        %591 = vmatprep.subr.bf16.mxu0 0
        %592 = vmatpush1.bf16.msra.mxu0 %v497
        %593 = vmatprep.subr.bf16.mxu0 0
        %594 = vmatpush1.bf16.msra.mxu0 %v498
        %595 = vmatprep.subr.bf16.mxu0 0
        %596 = vmatpush1.bf16.msra.mxu0 0
        %597 = vmatprep.subr.bf16.mxu0 0
        %598 = vmatpush1.bf16.msra.mxu0 0
        %599 = vmatprep.subr.bf16.mxu0 0
        %600 = vmatpush1.bf16.msra.mxu0 0
        %601 = vmatprep.subr.bf16.mxu0 0
        %602 = vmatpush1.bf16.msra.mxu0 0
        %603 = vmatprep.subr.bf16.mxu0 0
        %604 = vmatpush1.bf16.msra.mxu0 0
        %605 = vmatprep.subr.bf16.mxu0 0
        %606 = vmatpush1.bf16.msra.mxu0 0
        %607 = vmatprep.subr.bf16.mxu0 0
        %608 = vmatpush1.bf16.msra.mxu0 0
        %609 = vmatprep.subr.bf16.mxu0 0
        %610 = vmatpush1.bf16.msra.mxu0 0
        %611 = vmatprep.mubr.bf16.mxu0 0
        %612 = vmatmul.mubr.bf16.gmra.mrb[0].mxu0 %v483
        %v613 = vpop.f32.mrb[0].mxu0
        %v614 = vadd.f32 %v502, %v613
        %v615 = vpop.f32.mrb[0].mxu0
        %v616 = vpop.f32.mrb[0].mxu0
        %v617 = vadd.f32 %v507, %v616
        %v618 = vpop.f32.mrb[0].mxu0
        %619 = vmatprep.mubr.bf16.mxu0 0
        %620 = vmatmul.mubr.bf16.gmra.mrb[0].mxu0 %v484
        %v621 = vpop.f32.mrb[0].mxu0
        %v622 = vadd.f32 %v512, %v621
        %v623 = vpop.f32.mrb[0].mxu0
        %v624 = vpop.f32.mrb[0].mxu0
        %v625 = vadd.f32 %v517, %v624
        %v626 = vpop.f32.mrb[0].mxu0
        %627 = vmatprep.mubr.bf16.mxu0 0
        %628 = vmatmul.mubr.bf16.gmra.mrb[0].mxu0 %v485
        %v629 = vpop.f32.mrb[0].mxu0
        %v630 = vadd.f32 %v522, %v629
        %v631 = vpop.f32.mrb[0].mxu0
        %v632 = vpop.f32.mrb[0].mxu0
        %v633 = vadd.f32 %v527, %v632
        %v634 = vpop.f32.mrb[0].mxu0
        %635 = vmatprep.mubr.bf16.mxu0 0
        %636 = vmatmul.mubr.bf16.gmra.mrb[0].mxu0 %v486
        %v637 = vpop.f32.mrb[0].mxu0
        %v638 = vadd.f32 %v532, %v637
        %v639 = vpop.f32.mrb[0].mxu0
        %v640 = vpop.f32.mrb[0].mxu0
        %v641 = vadd.f32 %v537, %v640
        %v642 = vpop.f32.mrb[0].mxu0
        %643 = vmatprep.mubr.bf16.mxu0 0
        %644 = vmatmul.mubr.bf16.gmra.mrb[0].mxu0 %v487
        %v645 = vpop.f32.mrb[0].mxu0
        %v646 = vadd.f32 %v542, %v645
        %v647 = vpop.f32.mrb[0].mxu0
        %v648 = vpop.f32.mrb[0].mxu0
        %v649 = vadd.f32 %v547, %v648
        %v650 = vpop.f32.mrb[0].mxu0
        %651 = vmatprep.mubr.bf16.mxu0 0
        %652 = vmatmul.mubr.bf16.gmra.mrb[0].mxu0 %v488
        %v653 = vpop.f32.mrb[0].mxu0
        %v654 = vadd.f32 %v552, %v653
        %v655 = vpop.f32.mrb[0].mxu0
        %v656 = vpop.f32.mrb[0].mxu0
        %v657 = vadd.f32 %v557, %v656
        %v658 = vpop.f32.mrb[0].mxu0
        %659 = vmatprep.mubr.bf16.mxu0 0
        %660 = vmatmul.mubr.bf16.gmra.mrb[0].mxu0 %v489
        %v661 = vpop.f32.mrb[0].mxu0
        %v662 = vadd.f32 %v562, %v661
        %v663 = vpop.f32.mrb[0].mxu0
        %v664 = vpop.f32.mrb[0].mxu0
        %v665 = vadd.f32 %v567, %v664
        %v666 = vpop.f32.mrb[0].mxu0
        %667 = vmatprep.mubr.bf16.mxu0 0
        %668 = vmatmul.mubr.bf16.gmra.mrb[0].mxu0 %v490
        %v669 = vpop.f32.mrb[0].mxu0
        %v670 = vadd.f32 %v572, %v669
        %v671 = vpop.f32.mrb[0].mxu0
        %v672 = vpop.f32.mrb[0].mxu0
        %v673 = vadd.f32 %v577, %v672
        %v674 = vpop.f32.mrb[0].mxu0
        %675 = vdwg.mxu0
        %v676 = vmax.f32 %v614, 0.0
        %v677 = vmax.f32 %v617, 0.0
        %v678 = vmax.f32 %v622, 0.0
        %v679 = vmax.f32 %v625, 0.0
        %v680 = vmax.f32 %v630, 0.0
        %v681 = vmax.f32 %v633, 0.0
        %v682 = vmax.f32 %v638, 0.0
        %v683 = vmax.f32 %v641, 0.0
        %v684 = vmax.f32 %v646, 0.0
        %v685 = vmax.f32 %v649, 0.0
        %v686 = vmax.f32 %v654, 0.0
        %v687 = vmax.f32 %v657, 0.0
        %v688 = vmax.f32 %v662, 0.0
        %v689 = vmax.f32 %v665, 0.0
        %v690 = vmax.f32 %v670, 0.0
        %v691 = vmax.f32 %v673, 0.0
        %v692 = vpack.c.bf16 %v677, %v676
        %v693 = vpack.c.bf16 %v679, %v678
        %v694 = vpack.c.bf16 %v681, %v680
        %v695 = vpack.c.bf16 %v683, %v682
        %v696 = vpack.c.bf16 %v685, %v684
        %v697 = vpack.c.bf16 %v687, %v686
        %v698 = vpack.c.bf16 %v689, %v688
        %v699 = vpack.c.bf16 %v691, %v690
        %700 = vst [vmem:[#allocation3] sm:$0xff] %v692
        %701 = vst [vmem:[#allocation3 + $0x8] sm:$0xff] %v693
        %702 = vst [vmem:[#allocation3 + $0x10] sm:$0xff] %v694
        %703 = vst [vmem:[#allocation3 + $0x18] sm:$0xff] %v695
        %704 = vst [vmem:[#allocation3 + $0x20] sm:$0xff] %v696
        %705 = vst [vmem:[#allocation3 + $0x28] sm:$0xff] %v697
        %706 = vst [vmem:[#allocation3 + $0x30] sm:$0xff] %v698
        %707 = vst [vmem:[#allocation3 + $0x38] sm:$0xff] %v699
        // Predicated region
        $region105: #{tpu_custom_call.1} parent=27 // pred_check
          %p708 = pneg %p153
        $region106: #{tpu_custom_call.1} parent=27 // pred_check_branch
          %710 = sbr.rel (%p708) target = $region108
        $region107: #{tpu_custom_call.1} parent=27 // pred_region
          %711 = vst [vmem:[#allocation6] sm:$0xff] %v614
          %712 = vst [vmem:[#allocation6 + $0x8] sm:$0xff] %v617
          %713 = vst [vmem:[#allocation6 + $0x10] sm:$0xff] %v622
          %714 = vst [vmem:[#allocation6 + $0x18] sm:$0xff] %v625
          %715 = vst [vmem:[#allocation6 + $0x20] sm:$0xff] %v630
          %716 = vst [vmem:[#allocation6 + $0x28] sm:$0xff] %v633
          %717 = vst [vmem:[#allocation6 + $0x30] sm:$0xff] %v638
          %718 = vst [vmem:[#allocation6 + $0x38] sm:$0xff] %v641
          %719 = vst [vmem:[#allocation6 + $0x40] sm:$0xff] %v646
          %720 = vst [vmem:[#allocation6 + $0x48] sm:$0xff] %v649
          %721 = vst [vmem:[#allocation6 + $0x50] sm:$0xff] %v654
          %722 = vst [vmem:[#allocation6 + $0x58] sm:$0xff] %v657
          %723 = vst [vmem:[#allocation6 + $0x60] sm:$0xff] %v662
          %724 = vst [vmem:[#allocation6 + $0x68] sm:$0xff] %v665
          %725 = vst [vmem:[#allocation6 + $0x70] sm:$0xff] %v670
          %726 = vst [vmem:[#allocation6 + $0x78] sm:$0xff] %v673
        $region108: #{tpu_custom_call.1} parent=27 // pred_fallthru
          _
        // Predicated region
        $region109: #{tpu_custom_call.1} parent=27 // pred_check
          %p727 = pneg %p81
        $region110: #{tpu_custom_call.1} parent=27 // pred_check_branch
          %729 = sbr.rel (%p727) target = $region112
        $region111: #{tpu_custom_call.1} parent=27 // pred_region
          %s731 = ssub.s32 2048, 2048
          %732 = vsyncadd [#allocation7], %s731
          %s733 = sshll.u32 [#allocation6], 4
          %s734 = int_to_ptr.vmem [resolvable:$true] %s733
          %739 = dma.vmem_to_hbm [thread:$0]  %s734, 2048, %s4, [#allocation7], 128, 128, 8
        $region112: #{tpu_custom_call.1} parent=27 // pred_fallthru
          _
        // Predicated region
        $region113: #{tpu_custom_call.1} parent=27 // pred_check
          %p740 = pneg %p81
        $region114: #{tpu_custom_call.1} parent=27 // pred_check_branch
          %742 = sbr.rel (%p740) target = $region116
        $region115: #{tpu_custom_call.1} parent=27 // pred_region
          %743 = dma.done [#allocation7], 2048
        $region116: #{tpu_custom_call.1} parent=27 // pred_fallthru
          _
      $region28: #{tpu_custom_call.1} parent=5 // pred_fallthru
        _
      %p744 = scmp.le.s32.totalorder 2, %s11
      // Predicated region
      $region117: #{tpu_custom_call.1} parent=5 // pred_check
        %p745 = pneg %p744
      $region118: #{tpu_custom_call.1} parent=5 // pred_check_branch
        %747 = sbr.rel (%p745) target = $region120
      $region119: #{tpu_custom_call.1} parent=5 // pred_region
        %s748 = ssub.s32 %s11, 2
      $region120: #{tpu_custom_call.1} parent=5 // pred_fallthru
        _
    $region6: #{tpu_custom_call.1} parent=1 // loop_footer
      %s15 = sadd.s32 1, %s11
    $region7: #{tpu_custom_call.1} parent=1 // loop_footer_branch
      %10 = sbr.rel target = $region3
    $region8: #{tpu_custom_call.1} parent=1 // loop_exit
      _
    %749 = vsyncpa [#allocation7], 1
    %s750 = scalar_lea.sflag [#allocation7], 1
    %751 = vsyncpa %s750, 1
  %752 = vsyncmov [#allocation5]
  %s753 = vpop.sfrf %752
  %p754 = scmp.eq.s32.totalorder %s753, 0
  %p755 = pneg %p754
  %757 = shalt.err (%p755)
  %s758 = scalar_lea.sflag [#allocation5], 1
  %759 = vsyncmov %s758
  %s760 = vpop.sfrf %759
  %p761 = scmp.eq.s32.totalorder %s760, 0
  %p762 = pneg %p761
  %764 = shalt.err (%p762)

// kernel: tpu_custom_call.1
$region0: #{tpu_custom_call.1}
  #allocation0 [shape = 'u32[]', space=smem, size = 0x4, offset = 0x4, fixed_abs, tag = 'smem constant byte address 0x4 - core index']
  #allocation1 [shape = 'u32[144,128]{1,0:T(1,128)}', space=vmem, size = 0x12000, scoped, tag = 'internal scratch']
  #allocation2 [shape = 'bf16[1,128,128]{2,1,0:T(16,128)(2,1)}', space=vmem, size = 0x8000, scoped, tag = 'scratch operand']
  #allocation3 [shape = 'bf16[128,128]{1,0:T(16,128)(2,1)}', space=vmem, size = 0x8000, scoped, tag = 'scratch operand']
  #allocation4 [shape = 'bf16[128,128]{1,0:T(16,128)(2,1)}', space=vmem, size = 0x8000, scoped, tag = 'scratch operand']
  #allocation5 [shape = 's32[2]{0}', space=sflag, size = 0x8, scoped, tag = 'scratch operand']
  #allocation8 [shape = 's32[]', space=sflag, size = 0x4, offset = 0, fixed_abs, tag = 'sflag constant byte address 0x0 - dummy sync flag']
  #allocation9 [shape = 's32[]', space=sflag, size = 0x4, offset = 0, fixed_abs, tag = 'sflag constant byte address 0x0 - dummy sync flag']
  %s0 = inlined_call_operand.vmem [shape: bf16[1,128,128], index: 0, kind: input, shape index: {}]
  %s1 = inlined_call_operand.vmem [shape: bf16[128,128], index: 1, kind: input, shape index: {}]
  %s2 = inlined_call_operand.vmem [shape: bf16[5,128,128], index: 2, kind: input, shape index: {}]
  %s3 = inlined_call_operand.vmem [shape: f32[5,128,1], index: 3, kind: input, shape index: {}]
  %s4 = inlined_call_operand.hbm [shape: f32[128,128], index: 4, kind: output, shape index: {}]
  %s5 = sld [smem:[#allocation0]]
  $region121: #{tpu_custom_call.1} parent=0
    _
  %s7 = ssub.s32 1, %s5
  %s8 = scalar_select 0, %s7, %s5
  $region1: #{tpu_custom_call.1} parent=0
    #allocation6 [shape = 'u8[65536]{0}', space=vmem, size = 0x10000, scoped, tag = 'output window, operand 0, single buffered']
    #allocation7 [shape = 's32[2]{0}', space=sflag, size = 0x8, scoped, tag = 'scoped memory for tpu_custom_call.1']
    %9 = vsyncpa [#allocation7], 0
    loop: start=0, step=1, limit=7
    $region2: #{tpu_custom_call.1} parent=1 // loop_pre_header
      _
    $region3: #{tpu_custom_call.1} parent=1 // loop_header
      %s11 = sphi 0, %s15
      %p12 = scmp.ge.s32.totalorder %s11, 7
      %s21 = sphi 0, %s23
      %s24 = sphi 0, %s21
      %s25 = sphi 0, %s24
      %s41 = sphi 0, %s25
      %s47 = sphi 0, %s49
      %s50 = sphi 0, %s47
      %s51 = sphi 0, %s50
      %s67 = sphi 0, %s51
      %s71 = sphi 0, %s71
      %s73 = sphi 0, %s71
      %s74 = sphi 0, %s73
      %s88 = sphi 0, %s74
    $region4: #{tpu_custom_call.1} parent=1 // loop_header_branch
      %14 = sbr.rel (%p12) target = $region8
    $region5: #{tpu_custom_call.1} parent=1 // loop_body
      %s16 = ssub.s32 %s11, 1
      %s17 = ssub.s32 %s11, 2
      %s18 = sadd.s32 %s11, 1
      %s19 = ssub.s32 %s11, %s18
      %p20 = scmp.eq.s32.totalorder %s19, 0
      %s22 = sadd.s32 %s21, 1
      %s23 = scalar_select %p20, %s21, %s22
      %p26 = pneg %p20
      %p27 = scmp.eq.s32.totalorder %s11, 4
      %p28 = por %p26, %p27
      %p29 = scmp.ne.s32.totalorder %s21, %s24
      %p30 = scmp.eq.s32.totalorder %s11, 0
      %p31 = por %p29, %p30
      %p32 = scmp.ne.s32.totalorder %s21, %s24
      %p33 = scmp.eq.s32.totalorder %s16, 4
      %p34 = por %p32, %p33
      %p35 = scmp.ne.s32.totalorder %s24, %s25
      %p36 = scmp.eq.s32.totalorder %s16, 0
      %p37 = por %p35, %p36
      %p38 = scmp.ne.s32.totalorder %s24, %s25
      %p39 = scmp.eq.s32.totalorder %s17, 4
      %p40 = por %p38, %p39
      %p42 = scmp.ne.s32.totalorder %s25, %s41
      %p43 = scmp.eq.s32.totalorder %s17, 0
      %p44 = por %p42, %p43
      %s45 = ssub.s32 %s11, %s18
      %p46 = scmp.eq.s32.totalorder %s45, 0
      %s48 = sadd.s32 %s47, 1
      %s49 = scalar_select %p46, %s47, %s48
      %p52 = pneg %p46
      %p53 = scmp.eq.s32.totalorder %s11, 4
      %p54 = por %p52, %p53
      %p55 = scmp.ne.s32.totalorder %s47, %s50
      %p56 = scmp.eq.s32.totalorder %s11, 0
      %p57 = por %p55, %p56
      %p58 = scmp.ne.s32.totalorder %s47, %s50
      %p59 = scmp.eq.s32.totalorder %s16, 4
      %p60 = por %p58, %p59
      %p61 = scmp.ne.s32.totalorder %s50, %s51
      %p62 = scmp.eq.s32.totalorder %s16, 0
      %p63 = por %p61, %p62
      %p64 = scmp.ne.s32.totalorder %s50, %s51
      %p65 = scmp.eq.s32.totalorder %s17, 4
      %p66 = por %p64, %p65
      %p68 = scmp.ne.s32.totalorder %s51, %s67
      %p69 = scmp.eq.s32.totalorder %s17, 0
      %p70 = por %p68, %p69
      %s72 = sadd.s32 %s71, 1
      %p75 = scmp.eq.s32.totalorder %s11, 4
      %p76 = scmp.ne.s32.totalorder %s71, %s73
      %p77 = scmp.eq.s32.totalorder %s11, 0
      %p78 = por %p76, %p77
      %p79 = scmp.ne.s32.totalorder %s71, %s73
      %p80 = scmp.eq.s32.totalorder %s16, 4
      %p81 = por %p79, %p80
      %p82 = scmp.ne.s32.totalorder %s73, %s74
      %p83 = scmp.eq.s32.totalorder %s16, 0
      %p84 = por %p82, %p83
      %p85 = scmp.ne.s32.totalorder %s73, %s74
      %p86 = scmp.eq.s32.totalorder %s17, 4
      %p87 = por %p85, %p86
      %p89 = scmp.ne.s32.totalorder %s74, %s88
      %p90 = scmp.eq.s32.totalorder %s17, 0
      %p91 = por %p89, %p90
      %p92 = scmp.le.s32.totalorder 1, %s11
      %p93 = scmp.lt.s32.totalorder %s11, 6
      %p94 = pnand %p92, %p93
      %p95 = pneg %p94
      // Predicated region
      $region9: #{tpu_custom_call.1} parent=5 // pred_check
        _
      $region10: #{tpu_custom_call.1} parent=5 // pred_check_branch
        %97 = sbr.rel (%p94) target = $region12
      $region11: #{tpu_custom_call.1} parent=5 // pred_region
        %s98 = ssub.s32 %s11, 1
      $region12: #{tpu_custom_call.1} parent=5 // pred_fallthru
        _
      %p99 = scmp.lt.s32.totalorder %s11, 5
      // Predicated region
      $region13: #{tpu_custom_call.1} parent=5 // pred_check
        %p100 = pneg %p99
      $region14: #{tpu_custom_call.1} parent=5 // pred_check_branch
        %102 = sbr.rel (%p100) target = $region16
      $region15: #{tpu_custom_call.1} parent=5 // pred_region
        // Predicated region
        $region17: #{tpu_custom_call.1} parent=15 // pred_check
          %p103 = pneg %p31
        $region18: #{tpu_custom_call.1} parent=15 // pred_check_branch
          %105 = sbr.rel (%p103) target = $region20
        $region19: #{tpu_custom_call.1} parent=15 // pred_region
          %p106 = scmp.lt.s32.totalorder %s11, 4
          %s107 = scalar_select %p106, %s11, 4
          %s108 = smul.addr %s107, 16
          %s109 = smul.addr %s108, 4
          %s110 = scalar_lea.vmem %s2, %s109
        $region20: #{tpu_custom_call.1} parent=15 // pred_fallthru
          _
        // Predicated region
        $region21: #{tpu_custom_call.1} parent=15 // pred_check
          %p111 = pneg %p57
        $region22: #{tpu_custom_call.1} parent=15 // pred_check_branch
          %113 = sbr.rel (%p111) target = $region24
        $region23: #{tpu_custom_call.1} parent=15 // pred_region
          %p114 = scmp.lt.s32.totalorder %s11, 4
          %s115 = scalar_select %p114, %s11, 4
          %s116 = smul.addr %s115, 16
          %s117 = smul.addr %s116, 8
          %s118 = scalar_lea.vmem %s3, %s117
        $region24: #{tpu_custom_call.1} parent=15 // pred_fallthru
          _
      $region16: #{tpu_custom_call.1} parent=5 // pred_fallthru
        _
      %p119 = scmp.le.s32.totalorder 1, %s11
      %p120 = scmp.lt.s32.totalorder %s11, 6
      %p121 = pnand %p119, %p120
      %p122 = pneg %p121
      // Predicated region
      $region25: #{tpu_custom_call.1} parent=5 // pred_check
        _
      $region26: #{tpu_custom_call.1} parent=5 // pred_check_branch
        %124 = sbr.rel (%p121) target = $region28
      $region27: #{tpu_custom_call.1} parent=5 // pred_region
        %s125 = ssub.s32 %s11, 1
        %p126 = scmp.lt.s32.totalorder %s16, 4
        %s127 = scalar_select %p126, %s16, 4
        %s128 = smul.addr %s127, 16
        %s129 = smul.addr %s128, 4
        %s130 = scalar_lea.vmem %s2, %s129
        %p131 = pneg %p37
        %p132 = pneg %p34
        %p133 = scmp.lt.s32.totalorder %s16, 4
        %s134 = scalar_select %p133, %s16, 4
        %s135 = smul.addr %s134, 16
        %s136 = smul.addr %s135, 8
        %s137 = scalar_lea.vmem %s3, %s136
        %p138 = pneg %p63
        %p139 = pneg %p60
        %p140 = pneg %p84
        %p141 = pneg %p81
        %p142 = scmp.lt.s32.totalorder %s16, 4
        %s143 = scalar_select %p142, %s16, 4
        %s144 = smul.addr %s143, 16
        %s145 = smul.addr %s144, 4
        %s146 = scalar_lea.vmem %s2, %s145
        %p147 = scmp.lt.s32.totalorder %s16, 4
        %s148 = scalar_select %p147, %s16, 4
        %s149 = smul.addr %s148, 16
        %s150 = smul.addr %s149, 8
        %s151 = scalar_lea.vmem %s3, %s150
        %p153 = scmp.eq.s32.totalorder %s16, 4
        %p154 = scmp.eq.s32.totalorder %s16, 0
        // Predicated region
        $region29: #{tpu_custom_call.1} parent=27 // pred_check
          %p155 = pneg %p154
        $region30: #{tpu_custom_call.1} parent=27 // pred_check_branch
          %157 = sbr.rel (%p155) target = $region32
        $region31: #{tpu_custom_call.1} parent=27 // pred_region
          %p159 = scmp.lt.u32.totalorder 64, 8
          %p160 = pneg %p159
          // Predicated region
          $region33: #{tpu_custom_call.1} parent=31 // pred_check
            _
          $region34: #{tpu_custom_call.1} parent=31 // pred_check_branch
            %162 = sbr.rel (%p159) target = $region36
          $region35: #{tpu_custom_call.1} parent=31 // pred_region
            %s177 = sand.u32 64, 7
            %p178 = scmp.eq.s32.totalorder %s177, 0
            // Predicated region
            $region48: #{tpu_custom_call.1} parent=35 // pred_check
              %p179 = pneg %p178
            $region49: #{tpu_custom_call.1} parent=35 // pred_check_branch
              %181 = sbr.rel (%p179) target = $region51
            $region50: #{tpu_custom_call.1} parent=35 // pred_region
              loop: start=0, step=1, limit=1
              $region52: #{tpu_custom_call.1} parent=50 // loop_pre_header
                _
              $region53: #{tpu_custom_call.1} parent=50 // loop_header
                %s183 = sphi 0, %s187
                %p184 = scmp.ge.s32.totalorder %s183, 1
                %s188 = sphi %s0, %s0
                %s189 = sphi [#allocation2], [#allocation2]
              $region54: #{tpu_custom_call.1} parent=50 // loop_header_branch
                %186 = sbr.rel (%p184) target = $region58
              $region55: #{tpu_custom_call.1} parent=50 // loop_body
                %v190 = vld [vmem:[%s188] sm:$0xff]
                %191 = vst [vmem:[%s189] sm:$0xff] %v190
                %v192 = vld [vmem:[%s188 + $0x8] sm:$0xff]
                %193 = vst [vmem:[%s189 + $0x8] sm:$0xff] %v192
                %v194 = vld [vmem:[%s188 + $0x10] sm:$0xff]
                %195 = vst [vmem:[%s189 + $0x10] sm:$0xff] %v194
                %v196 = vld [vmem:[%s188 + $0x18] sm:$0xff]
                %197 = vst [vmem:[%s189 + $0x18] sm:$0xff] %v196
                %v198 = vld [vmem:[%s188 + $0x20] sm:$0xff]
                %199 = vst [vmem:[%s189 + $0x20] sm:$0xff] %v198
                %v200 = vld [vmem:[%s188 + $0x28] sm:$0xff]
                %201 = vst [vmem:[%s189 + $0x28] sm:$0xff] %v200
                %v202 = vld [vmem:[%s188 + $0x30] sm:$0xff]
                %203 = vst [vmem:[%s189 + $0x30] sm:$0xff] %v202
                %v204 = vld [vmem:[%s188 + $0x38] sm:$0xff]
                %205 = vst [vmem:[%s189 + $0x38] sm:$0xff] %v204
              $region56: #{tpu_custom_call.1} parent=50 // loop_footer
                %s187 = sadd.s32 1, %s183
              $region57: #{tpu_custom_call.1} parent=50 // loop_footer_branch
                %182 = sbr.rel target = $region53
              $region58: #{tpu_custom_call.1} parent=50 // loop_exit
                _
            $region51: #{tpu_custom_call.1} parent=35 // pred_fallthru
              _
            %p206 = pneg %p178
            // Predicated region
            $region59: #{tpu_custom_call.1} parent=35 // pred_check
              _
            $region60: #{tpu_custom_call.1} parent=35 // pred_check_branch
              %208 = sbr.rel (%p178) target = $region62
            $region61: #{tpu_custom_call.1} parent=35 // pred_region
              %s209 = sand.u32 64, 7
            $region62: #{tpu_custom_call.1} parent=35 // pred_fallthru
              _
          $region36: #{tpu_custom_call.1} parent=31 // pred_fallthru
            _
          // Predicated region
          $region37: #{tpu_custom_call.1} parent=31 // pred_check
            %p163 = pneg %p159
          $region38: #{tpu_custom_call.1} parent=31 // pred_check_branch
            %165 = sbr.rel (%p163) target = $region40
          $region39: #{tpu_custom_call.1} parent=31 // pred_region
            %s166 = sshllo.u32 0, 64
            loop: start=0, step=1, limit=1
            $region41: #{tpu_custom_call.1} parent=39 // loop_pre_header
              _
            $region42: #{tpu_custom_call.1} parent=39 // loop_header
              %s168 = sphi 0, %s172
              %p169 = scmp.ge.s32.totalorder %s168, 1
              %s173 = sphi %s0, %s0
              %s174 = sphi [#allocation2], [#allocation2]
            $region43: #{tpu_custom_call.1} parent=39 // loop_header_branch
              %171 = sbr.rel (%p169) target = $region47
            $region44: #{tpu_custom_call.1} parent=39 // loop_body
              %v175 = vld [vmem:[%s173] sm:%s166]
              %176 = vst [vmem:[%s174] sm:%s166] %v175
            $region45: #{tpu_custom_call.1} parent=39 // loop_footer
              %s172 = sadd.s32 1, %s168
            $region46: #{tpu_custom_call.1} parent=39 // loop_footer_branch
              %167 = sbr.rel target = $region42
            $region47: #{tpu_custom_call.1} parent=39 // loop_exit
              _
          $region40: #{tpu_custom_call.1} parent=31 // pred_fallthru
            _
          // Predicated region
          $region63: #{tpu_custom_call.1} parent=31 // pred_check
            _
          $region64: #{tpu_custom_call.1} parent=31 // pred_check_branch
            %212 = sbr.rel (0) target = $region66
          $region65: #{tpu_custom_call.1} parent=31 // pred_region
            %213 = vsyncadd [#allocation5], 1024
          $region66: #{tpu_custom_call.1} parent=31 // pred_fallthru
            _
          %s214 = scalar_lea.sflag [#allocation5], 1
          %p216 = scmp.lt.u32.totalorder 64, 8
          %p217 = pneg %p216
          // Predicated region
          $region67: #{tpu_custom_call.1} parent=31 // pred_check
            _
          $region68: #{tpu_custom_call.1} parent=31 // pred_check_branch
            %219 = sbr.rel (%p216) target = $region70
          $region69: #{tpu_custom_call.1} parent=31 // pred_region
            %s234 = sand.u32 64, 7
            %p235 = scmp.eq.s32.totalorder %s234, 0
            // Predicated region
            $region82: #{tpu_custom_call.1} parent=69 // pred_check
              %p236 = pneg %p235
            $region83: #{tpu_custom_call.1} parent=69 // pred_check_branch
              %238 = sbr.rel (%p236) target = $region85
            $region84: #{tpu_custom_call.1} parent=69 // pred_region
              loop: start=0, step=1, limit=1
              $region86: #{tpu_custom_call.1} parent=84 // loop_pre_header
                _
              $region87: #{tpu_custom_call.1} parent=84 // loop_header
                %s240 = sphi 0, %s244
                %p241 = scmp.ge.s32.totalorder %s240, 1
                %s245 = sphi %s1, %s1
                %s246 = sphi [#allocation3], [#allocation3]
              $region88: #{tpu_custom_call.1} parent=84 // loop_header_branch
                %243 = sbr.rel (%p241) target = $region92
              $region89: #{tpu_custom_call.1} parent=84 // loop_body
                %v247 = vld [vmem:[%s245] sm:$0xff]
                %248 = vst [vmem:[%s246] sm:$0xff] %v247
                %v249 = vld [vmem:[%s245 + $0x8] sm:$0xff]
                %250 = vst [vmem:[%s246 + $0x8] sm:$0xff] %v249
                %v251 = vld [vmem:[%s245 + $0x10] sm:$0xff]
                %252 = vst [vmem:[%s246 + $0x10] sm:$0xff] %v251
                %v253 = vld [vmem:[%s245 + $0x18] sm:$0xff]
                %254 = vst [vmem:[%s246 + $0x18] sm:$0xff] %v253
                %v255 = vld [vmem:[%s245 + $0x20] sm:$0xff]
                %256 = vst [vmem:[%s246 + $0x20] sm:$0xff] %v255
                %v257 = vld [vmem:[%s245 + $0x28] sm:$0xff]
                %258 = vst [vmem:[%s246 + $0x28] sm:$0xff] %v257
                %v259 = vld [vmem:[%s245 + $0x30] sm:$0xff]
                %260 = vst [vmem:[%s246 + $0x30] sm:$0xff] %v259
                %v261 = vld [vmem:[%s245 + $0x38] sm:$0xff]
                %262 = vst [vmem:[%s246 + $0x38] sm:$0xff] %v261
              $region90: #{tpu_custom_call.1} parent=84 // loop_footer
                %s244 = sadd.s32 1, %s240
              $region91: #{tpu_custom_call.1} parent=84 // loop_footer_branch
                %239 = sbr.rel target = $region87
              $region92: #{tpu_custom_call.1} parent=84 // loop_exit
                _
            $region85: #{tpu_custom_call.1} parent=69 // pred_fallthru
              _
            %p263 = pneg %p235
            // Predicated region
            $region93: #{tpu_custom_call.1} parent=69 // pred_check
              _
            $region94: #{tpu_custom_call.1} parent=69 // pred_check_branch
              %265 = sbr.rel (%p235) target = $region96
            $region95: #{tpu_custom_call.1} parent=69 // pred_region
              %s266 = sand.u32 64, 7
            $region96: #{tpu_custom_call.1} parent=69 // pred_fallthru
              _
          $region70: #{tpu_custom_call.1} parent=31 // pred_fallthru
            _
          // Predicated region
          $region71: #{tpu_custom_call.1} parent=31 // pred_check
            %p220 = pneg %p216
          $region72: #{tpu_custom_call.1} parent=31 // pred_check_branch
            %222 = sbr.rel (%p220) target = $region74
          $region73: #{tpu_custom_call.1} parent=31 // pred_region
            %s223 = sshllo.u32 0, 64
            loop: start=0, step=1, limit=1
            $region75: #{tpu_custom_call.1} parent=73 // loop_pre_header
              _
            $region76: #{tpu_custom_call.1} parent=73 // loop_header
              %s225 = sphi 0, %s229
              %p226 = scmp.ge.s32.totalorder %s225, 1
              %s230 = sphi %s1, %s1
              %s231 = sphi [#allocation3], [#allocation3]
            $region77: #{tpu_custom_call.1} parent=73 // loop_header_branch
              %228 = sbr.rel (%p226) target = $region81
            $region78: #{tpu_custom_call.1} parent=73 // loop_body
              %v232 = vld [vmem:[%s230] sm:%s223]
              %233 = vst [vmem:[%s231] sm:%s223] %v232
            $region79: #{tpu_custom_call.1} parent=73 // loop_footer
              %s229 = sadd.s32 1, %s225
            $region80: #{tpu_custom_call.1} parent=73 // loop_footer_branch
              %224 = sbr.rel target = $region76
            $region81: #{tpu_custom_call.1} parent=73 // loop_exit
              _
          $region74: #{tpu_custom_call.1} parent=31 // pred_fallthru
            _
          // Predicated region
          $region97: #{tpu_custom_call.1} parent=31 // pred_check
            _
          $region98: #{tpu_custom_call.1} parent=31 // pred_check_branch
            %269 = sbr.rel (0) target = $region100
          $region99: #{tpu_custom_call.1} parent=31 // pred_region
            %270 = vsyncadd %s214, 1024
          $region100: #{tpu_custom_call.1} parent=31 // pred_fallthru
            _
          %s271 = smul.u32 4, 16
          %s272 = smul.u32 %s271, 1
          %s273 = sshll.u32 %s272, 4
          %274 = dma.done %s214, %s273
        $region32: #{tpu_custom_call.1} parent=27 // pred_fallthru
          _
        %v275 = vld [vmem:[%s146] sm:$0xf]
        %v276 = vld [vmem:[%s146 + $0x4] sm:$0xf]
        %v277 = vld [vmem:[%s146 + $0x8] sm:$0xf]
        %v278 = vld [vmem:[%s146 + $0xc] sm:$0xf]
        %v279 = vld [vmem:[%s146 + $0x10] sm:$0xf]
        %v280 = vld [vmem:[%s146 + $0x14] sm:$0xf]
        %v281 = vld [vmem:[%s146 + $0x18] sm:$0xf]
        %v282 = vld [vmem:[%s146 + $0x1c] sm:$0xf]
        %v283 = vld [vmem:[%s146 + $0x20] sm:$0xf]
        %v284 = vld [vmem:[%s146 + $0x24] sm:$0xf]
        %v285 = vld [vmem:[%s146 + $0x28] sm:$0xf]
        %v286 = vld [vmem:[%s146 + $0x2c] sm:$0xf]
        %v287 = vld [vmem:[%s146 + $0x30] sm:$0xf]
        %v288 = vld [vmem:[%s146 + $0x34] sm:$0xf]
        %v289 = vld [vmem:[%s146 + $0x38] sm:$0xf]
        %v290 = vld [vmem:[%s146 + $0x3c] sm:$0xf]
        %v291 = vld [vmem:[#allocation3] sm:$0xff]
        %v292 = vld [vmem:[#allocation3 + $0x8] sm:$0xff]
        %v293 = vld [vmem:[#allocation3 + $0x10] sm:$0xff]
        %v294 = vld [vmem:[#allocation3 + $0x18] sm:$0xff]
        %v295 = vld [vmem:[#allocation3 + $0x20] sm:$0xff]
        %v296 = vld [vmem:[#allocation3 + $0x28] sm:$0xff]
        %v297 = vld [vmem:[#allocation3 + $0x30] sm:$0xff]
        %v298 = vld [vmem:[#allocation3 + $0x38] sm:$0xff]
        %v315 = vunpack.c.l.b16 %v275
        %v316 = vunpack.c.l.b16 %v276
        %v317 = vunpack.c.l.b16 %v277
        %v318 = vunpack.c.l.b16 %v278
        %v319 = vunpack.c.l.b16 %v279
        %v320 = vunpack.c.l.b16 %v280
        %v321 = vunpack.c.l.b16 %v281
        %v322 = vunpack.c.l.b16 %v282
        %v323 = vunpack.c.l.b16 %v283
        %v324 = vunpack.c.l.b16 %v284
        %v325 = vunpack.c.l.b16 %v285
        %v326 = vunpack.c.l.b16 %v286
        %v327 = vunpack.c.l.b16 %v287
        %v328 = vunpack.c.l.b16 %v288
        %v329 = vunpack.c.l.b16 %v289
        %v330 = vunpack.c.l.b16 %v290
        %v331 = vpack.c.b16 %v316, %v315
        %v332 = vpack.c.b16 %v318, %v317
        %v333 = vpack.c.b16 %v320, %v319
        %v334 = vpack.c.b16 %v322, %v321
        %v335 = vpack.c.b16 %v324, %v323
        %v336 = vpack.c.b16 %v326, %v325
        %v337 = vpack.c.b16 %v328, %v327
        %v338 = vpack.c.b16 %v330, %v329
        %347 = vmatprep.subr.bf16.mxu0 0
        %348 = vmatpush1.bf16.msra.mxu0 %v291
        %349 = vmatprep.subr.bf16.mxu0 0
        %350 = vmatpush1.bf16.msra.mxu0 %v292
        %351 = vmatprep.subr.bf16.mxu0 0
        %352 = vmatpush1.bf16.msra.mxu0 %v293
        %353 = vmatprep.subr.bf16.mxu0 0
        %354 = vmatpush1.bf16.msra.mxu0 %v294
        %355 = vmatprep.subr.bf16.mxu0 0
        %356 = vmatpush1.bf16.msra.mxu0 %v295
        %357 = vmatprep.subr.bf16.mxu0 0
        %358 = vmatpush1.bf16.msra.mxu0 %v296
        %359 = vmatprep.subr.bf16.mxu0 0
        %360 = vmatpush1.bf16.msra.mxu0 %v297
        %361 = vmatprep.subr.bf16.mxu0 0
        %362 = vmatpush1.bf16.msra.mxu0 %v298
        %363 = vmatprep.subr.bf16.mxu0 0
        %364 = vmatpush1.bf16.msra.mxu0 0
        %365 = vmatprep.subr.bf16.mxu0 0
        %366 = vmatpush1.bf16.msra.mxu0 0
        %367 = vmatprep.subr.bf16.mxu0 0
        %368 = vmatpush1.bf16.msra.mxu0 0
        %369 = vmatprep.subr.bf16.mxu0 0
        %370 = vmatpush1.bf16.msra.mxu0 0
        %371 = vmatprep.subr.bf16.mxu0 0
        %372 = vmatpush1.bf16.msra.mxu0 0
        %373 = vmatprep.subr.bf16.mxu0 0
        %374 = vmatpush1.bf16.msra.mxu0 0
        %375 = vmatprep.subr.bf16.mxu0 0
        %376 = vmatpush1.bf16.msra.mxu0 0
        %377 = vmatprep.subr.bf16.mxu0 0
        %378 = vmatpush1.bf16.msra.mxu0 0
        %379 = vmatprep.mubr.bf16.mxu0 0
        %380 = vmatmul.mubr.bf16.gmra.mrb[0].mxu0 %v331
        %v381 = vpop.f32.mrb[0].mxu0
        %v382 = vadd.f32 0.0, %v381
        %v383 = vpop.f32.mrb[0].mxu0
        %v384 = vpop.f32.mrb[0].mxu0
        %v385 = vadd.f32 0.0, %v384
        %v386 = vpop.f32.mrb[0].mxu0
        %387 = vmatprep.mubr.bf16.mxu0 0
        %388 = vmatmul.mubr.bf16.gmra.mrb[0].mxu0 %v332
        %v389 = vpop.f32.mrb[0].mxu0
        %v390 = vadd.f32 0.0, %v389
        %v391 = vpop.f32.mrb[0].mxu0
        %v392 = vpop.f32.mrb[0].mxu0
        %v393 = vadd.f32 0.0, %v392
        %v394 = vpop.f32.mrb[0].mxu0
        %395 = vmatprep.mubr.bf16.mxu0 0
        %396 = vmatmul.mubr.bf16.gmra.mrb[0].mxu0 %v333
        %v397 = vpop.f32.mrb[0].mxu0
        %v398 = vadd.f32 0.0, %v397
        %v399 = vpop.f32.mrb[0].mxu0
        %v400 = vpop.f32.mrb[0].mxu0
        %v401 = vadd.f32 0.0, %v400
        %v402 = vpop.f32.mrb[0].mxu0
        %403 = vmatprep.mubr.bf16.mxu0 0
        %404 = vmatmul.mubr.bf16.gmra.mrb[0].mxu0 %v334
        %v405 = vpop.f32.mrb[0].mxu0
        %v406 = vadd.f32 0.0, %v405
        %v407 = vpop.f32.mrb[0].mxu0
        %v408 = vpop.f32.mrb[0].mxu0
        %v409 = vadd.f32 0.0, %v408
        %v410 = vpop.f32.mrb[0].mxu0
        %411 = vmatprep.mubr.bf16.mxu0 0
        %412 = vmatmul.mubr.bf16.gmra.mrb[0].mxu0 %v335
        %v413 = vpop.f32.mrb[0].mxu0
        %v414 = vadd.f32 0.0, %v413
        %v415 = vpop.f32.mrb[0].mxu0
        %v416 = vpop.f32.mrb[0].mxu0
        %v417 = vadd.f32 0.0, %v416
        %v418 = vpop.f32.mrb[0].mxu0
        %419 = vmatprep.mubr.bf16.mxu0 0
        %420 = vmatmul.mubr.bf16.gmra.mrb[0].mxu0 %v336
        %v421 = vpop.f32.mrb[0].mxu0
        %v422 = vadd.f32 0.0, %v421
        %v423 = vpop.f32.mrb[0].mxu0
        %v424 = vpop.f32.mrb[0].mxu0
        %v425 = vadd.f32 0.0, %v424
        %v426 = vpop.f32.mrb[0].mxu0
        %427 = vmatprep.mubr.bf16.mxu0 0
        %428 = vmatmul.mubr.bf16.gmra.mrb[0].mxu0 %v337
        %v429 = vpop.f32.mrb[0].mxu0
        %v430 = vadd.f32 0.0, %v429
        %v431 = vpop.f32.mrb[0].mxu0
        %v432 = vpop.f32.mrb[0].mxu0
        %v433 = vadd.f32 0.0, %v432
        %v434 = vpop.f32.mrb[0].mxu0
        %435 = vmatprep.mubr.bf16.mxu0 0
        %436 = vmatmul.mubr.bf16.gmra.mrb[0].mxu0 %v338
        %v437 = vpop.f32.mrb[0].mxu0
        %v438 = vadd.f32 0.0, %v437
        %v439 = vpop.f32.mrb[0].mxu0
        %v440 = vpop.f32.mrb[0].mxu0
        %v441 = vadd.f32 0.0, %v440
        %v442 = vpop.f32.mrb[0].mxu0
        %443 = vdwg.mxu0
        %v444 = vpack.c.bf16 %v385, %v382
        %v445 = vpack.c.bf16 %v393, %v390
        %v446 = vpack.c.bf16 %v401, %v398
        %v447 = vpack.c.bf16 %v409, %v406
        %v448 = vpack.c.bf16 %v417, %v414
        %v449 = vpack.c.bf16 %v425, %v422
        %v450 = vpack.c.bf16 %v433, %v430
        %v451 = vpack.c.bf16 %v441, %v438
        %452 = vst [vmem:[#allocation4] sm:$0xff] %v444
        %453 = vst [vmem:[#allocation4 + $0x8] sm:$0xff] %v445
        %454 = vst [vmem:[#allocation4 + $0x10] sm:$0xff] %v446
        %455 = vst [vmem:[#allocation4 + $0x18] sm:$0xff] %v447
        %456 = vst [vmem:[#allocation4 + $0x20] sm:$0xff] %v448
        %457 = vst [vmem:[#allocation4 + $0x28] sm:$0xff] %v449
        %458 = vst [vmem:[#allocation4 + $0x30] sm:$0xff] %v450
        %459 = vst [vmem:[#allocation4 + $0x38] sm:$0xff] %v451
        %v460 = vld [vmem:[%s151] sm:$0xff]
        %v461 = vld [vmem:[%s151 + $0x8] sm:$0xff]
        %v462 = vld [vmem:[%s151 + $0x10] sm:$0xff]
        %v463 = vld [vmem:[%s151 + $0x18] sm:$0xff]
        %v464 = vld [vmem:[%s151 + $0x20] sm:$0xff]
        %v465 = vld [vmem:[%s151 + $0x28] sm:$0xff]
        %v466 = vld [vmem:[%s151 + $0x30] sm:$0xff]
        %v467 = vld [vmem:[%s151 + $0x38] sm:$0xff]
        %v468 = vld [vmem:[%s151 + $0x40] sm:$0xff]
        %v469 = vld [vmem:[%s151 + $0x48] sm:$0xff]
        %v470 = vld [vmem:[%s151 + $0x50] sm:$0xff]
        %v471 = vld [vmem:[%s151 + $0x58] sm:$0xff]
        %v472 = vld [vmem:[%s151 + $0x60] sm:$0xff]
        %v473 = vld [vmem:[%s151 + $0x68] sm:$0xff]
        %v474 = vld [vmem:[%s151 + $0x70] sm:$0xff]
        %v475 = vld [vmem:[%s151 + $0x78] sm:$0xff]
        // Predicated region
        $region101: #{tpu_custom_call.1} parent=27 // pred_check
          %p476 = pneg %p154
        $region102: #{tpu_custom_call.1} parent=27 // pred_check_branch
          %478 = sbr.rel (%p476) target = $region104
        $region103: #{tpu_custom_call.1} parent=27 // pred_region
          %s479 = smul.u32 4, 16
          %s480 = smul.u32 %s479, 1
          %s481 = sshll.u32 %s480, 4
          %482 = dma.done [#allocation5], %s481
        $region104: #{tpu_custom_call.1} parent=27 // pred_fallthru
          _
        %v483 = vld [vmem:[#allocation4] sm:$0xff]
        %v484 = vld [vmem:[#allocation4 + $0x8] sm:$0xff]
        %v485 = vld [vmem:[#allocation4 + $0x10] sm:$0xff]
        %v486 = vld [vmem:[#allocation4 + $0x18] sm:$0xff]
        %v487 = vld [vmem:[#allocation4 + $0x20] sm:$0xff]
        %v488 = vld [vmem:[#allocation4 + $0x28] sm:$0xff]
        %v489 = vld [vmem:[#allocation4 + $0x30] sm:$0xff]
        %v490 = vld [vmem:[#allocation4 + $0x38] sm:$0xff]
        %v491 = vld [vmem:[#allocation2] sm:$0xff]
        %v492 = vld [vmem:[#allocation2 + $0x8] sm:$0xff]
        %v493 = vld [vmem:[#allocation2 + $0x10] sm:$0xff]
        %v494 = vld [vmem:[#allocation2 + $0x18] sm:$0xff]
        %v495 = vld [vmem:[#allocation2 + $0x20] sm:$0xff]
        %v496 = vld [vmem:[#allocation2 + $0x28] sm:$0xff]
        %v497 = vld [vmem:[#allocation2 + $0x30] sm:$0xff]
        %v498 = vld [vmem:[#allocation2 + $0x38] sm:$0xff]
        %500 = vset.pattern.permute.xlu0 0
        %501 = vperm.xlu0 %500, %v460
        %v502 = vpop.permute.xlu0 %501
        %505 = vset.pattern.permute.xlu0 0
        %506 = vperm.xlu0 %505, %v461
        %v507 = vpop.permute.xlu0 %506
        %510 = vset.pattern.permute.xlu0 0
        %511 = vperm.xlu0 %510, %v462
        %v512 = vpop.permute.xlu0 %511
        %515 = vset.pattern.permute.xlu0 0
        %516 = vperm.xlu0 %515, %v463
        %v517 = vpop.permute.xlu0 %516
        %520 = vset.pattern.permute.xlu0 0
        %521 = vperm.xlu0 %520, %v464
        %v522 = vpop.permute.xlu0 %521
        %525 = vset.pattern.permute.xlu0 0
        %526 = vperm.xlu0 %525, %v465
        %v527 = vpop.permute.xlu0 %526
        %530 = vset.pattern.permute.xlu0 0
        %531 = vperm.xlu0 %530, %v466
        %v532 = vpop.permute.xlu0 %531
        %535 = vset.pattern.permute.xlu0 0
        %536 = vperm.xlu0 %535, %v467
        %v537 = vpop.permute.xlu0 %536
        %540 = vset.pattern.permute.xlu0 0
        %541 = vperm.xlu0 %540, %v468
        %v542 = vpop.permute.xlu0 %541
        %545 = vset.pattern.permute.xlu0 0
        %546 = vperm.xlu0 %545, %v469
        %v547 = vpop.permute.xlu0 %546
        %550 = vset.pattern.permute.xlu0 0
        %551 = vperm.xlu0 %550, %v470
        %v552 = vpop.permute.xlu0 %551
        %555 = vset.pattern.permute.xlu0 0
        %556 = vperm.xlu0 %555, %v471
        %v557 = vpop.permute.xlu0 %556
        %560 = vset.pattern.permute.xlu0 0
        %561 = vperm.xlu0 %560, %v472
        %v562 = vpop.permute.xlu0 %561
        %565 = vset.pattern.permute.xlu0 0
        %566 = vperm.xlu0 %565, %v473
        %v567 = vpop.permute.xlu0 %566
        %570 = vset.pattern.permute.xlu0 0
        %571 = vperm.xlu0 %570, %v474
        %v572 = vpop.permute.xlu0 %571
        %575 = vset.pattern.permute.xlu0 0
        %576 = vperm.xlu0 %575, %v475
        %v577 = vpop.permute.xlu0 %576
        %579 = vmatprep.subr.bf16.mxu0 0
        %580 = vmatpush1.bf16.msra.mxu0 %v491
        %581 = vmatprep.subr.bf16.mxu0 0
        %582 = vmatpush1.bf16.msra.mxu0 %v492
        %583 = vmatprep.subr.bf16.mxu0 0
        %584 = vmatpush1.bf16.msra.mxu0 %v493
        %585 = vmatprep.subr.bf16.mxu0 0
        %586 = vmatpush1.bf16.msra.mxu0 %v494
        %587 = vmatprep.subr.bf16.mxu0 0
        %588 = vmatpush1.bf16.msra.mxu0 %v495
        %589 = vmatprep.subr.bf16.mxu0 0
        %590 = vmatpush1.bf16.msra.mxu0 %v496
        %591 = vmatprep.subr.bf16.mxu0 0
        %592 = vmatpush1.bf16.msra.mxu0 %v497
        %593 = vmatprep.subr.bf16.mxu0 0
        %594 = vmatpush1.bf16.msra.mxu0 %v498
        %595 = vmatprep.subr.bf16.mxu0 0
        %596 = vmatpush1.bf16.msra.mxu0 0
        %597 = vmatprep.subr.bf16.mxu0 0
        %598 = vmatpush1.bf16.msra.mxu0 0
        %599 = vmatprep.subr.bf16.mxu0 0
        %600 = vmatpush1.bf16.msra.mxu0 0
        %601 = vmatprep.subr.bf16.mxu0 0
        %602 = vmatpush1.bf16.msra.mxu0 0
        %603 = vmatprep.subr.bf16.mxu0 0
        %604 = vmatpush1.bf16.msra.mxu0 0
        %605 = vmatprep.subr.bf16.mxu0 0
        %606 = vmatpush1.bf16.msra.mxu0 0
        %607 = vmatprep.subr.bf16.mxu0 0
        %608 = vmatpush1.bf16.msra.mxu0 0
        %609 = vmatprep.subr.bf16.mxu0 0
        %610 = vmatpush1.bf16.msra.mxu0 0
        %611 = vmatprep.mubr.bf16.mxu0 0
        %612 = vmatmul.mubr.bf16.gmra.mrb[0].mxu0 %v483
        %v613 = vpop.f32.mrb[0].mxu0
        %v614 = vadd.f32 %v502, %v613
        %v615 = vpop.f32.mrb[0].mxu0
        %v616 = vpop.f32.mrb[0].mxu0
        %v617 = vadd.f32 %v507, %v616
        %v618 = vpop.f32.mrb[0].mxu0
        %619 = vmatprep.mubr.bf16.mxu0 0
        %620 = vmatmul.mubr.bf16.gmra.mrb[0].mxu0 %v484
        %v621 = vpop.f32.mrb[0].mxu0
        %v622 = vadd.f32 %v512, %v621
        %v623 = vpop.f32.mrb[0].mxu0
        %v624 = vpop.f32.mrb[0].mxu0
        %v625 = vadd.f32 %v517, %v624
        %v626 = vpop.f32.mrb[0].mxu0
        %627 = vmatprep.mubr.bf16.mxu0 0
        %628 = vmatmul.mubr.bf16.gmra.mrb[0].mxu0 %v485
        %v629 = vpop.f32.mrb[0].mxu0
        %v630 = vadd.f32 %v522, %v629
        %v631 = vpop.f32.mrb[0].mxu0
        %v632 = vpop.f32.mrb[0].mxu0
        %v633 = vadd.f32 %v527, %v632
        %v634 = vpop.f32.mrb[0].mxu0
        %635 = vmatprep.mubr.bf16.mxu0 0
        %636 = vmatmul.mubr.bf16.gmra.mrb[0].mxu0 %v486
        %v637 = vpop.f32.mrb[0].mxu0
        %v638 = vadd.f32 %v532, %v637
        %v639 = vpop.f32.mrb[0].mxu0
        %v640 = vpop.f32.mrb[0].mxu0
        %v641 = vadd.f32 %v537, %v640
        %v642 = vpop.f32.mrb[0].mxu0
        %643 = vmatprep.mubr.bf16.mxu0 0
        %644 = vmatmul.mubr.bf16.gmra.mrb[0].mxu0 %v487
        %v645 = vpop.f32.mrb[0].mxu0
        %v646 = vadd.f32 %v542, %v645
        %v647 = vpop.f32.mrb[0].mxu0
        %v648 = vpop.f32.mrb[0].mxu0
        %v649 = vadd.f32 %v547, %v648
        %v650 = vpop.f32.mrb[0].mxu0
        %651 = vmatprep.mubr.bf16.mxu0 0
        %652 = vmatmul.mubr.bf16.gmra.mrb[0].mxu0 %v488
        %v653 = vpop.f32.mrb[0].mxu0
        %v654 = vadd.f32 %v552, %v653
        %v655 = vpop.f32.mrb[0].mxu0
        %v656 = vpop.f32.mrb[0].mxu0
        %v657 = vadd.f32 %v557, %v656
        %v658 = vpop.f32.mrb[0].mxu0
        %659 = vmatprep.mubr.bf16.mxu0 0
        %660 = vmatmul.mubr.bf16.gmra.mrb[0].mxu0 %v489
        %v661 = vpop.f32.mrb[0].mxu0
        %v662 = vadd.f32 %v562, %v661
        %v663 = vpop.f32.mrb[0].mxu0
        %v664 = vpop.f32.mrb[0].mxu0
        %v665 = vadd.f32 %v567, %v664
        %v666 = vpop.f32.mrb[0].mxu0
        %667 = vmatprep.mubr.bf16.mxu0 0
        %668 = vmatmul.mubr.bf16.gmra.mrb[0].mxu0 %v490
        %v669 = vpop.f32.mrb[0].mxu0
        %v670 = vadd.f32 %v572, %v669
        %v671 = vpop.f32.mrb[0].mxu0
        %v672 = vpop.f32.mrb[0].mxu0
        %v673 = vadd.f32 %v577, %v672
        %v674 = vpop.f32.mrb[0].mxu0
        %675 = vdwg.mxu0
        %v676 = vmax.f32 %v614, 0.0
        %v677 = vmax.f32 %v617, 0.0
        %v678 = vmax.f32 %v622, 0.0
        %v679 = vmax.f32 %v625, 0.0
        %v680 = vmax.f32 %v630, 0.0
        %v681 = vmax.f32 %v633, 0.0
        %v682 = vmax.f32 %v638, 0.0
        %v683 = vmax.f32 %v641, 0.0
        %v684 = vmax.f32 %v646, 0.0
        %v685 = vmax.f32 %v649, 0.0
        %v686 = vmax.f32 %v654, 0.0
        %v687 = vmax.f32 %v657, 0.0
        %v688 = vmax.f32 %v662, 0.0
        %v689 = vmax.f32 %v665, 0.0
        %v690 = vmax.f32 %v670, 0.0
        %v691 = vmax.f32 %v673, 0.0
        %v692 = vpack.c.bf16 %v677, %v676
        %v693 = vpack.c.bf16 %v679, %v678
        %v694 = vpack.c.bf16 %v681, %v680
        %v695 = vpack.c.bf16 %v683, %v682
        %v696 = vpack.c.bf16 %v685, %v684
        %v697 = vpack.c.bf16 %v687, %v686
        %v698 = vpack.c.bf16 %v689, %v688
        %v699 = vpack.c.bf16 %v691, %v690
        %700 = vst [vmem:[#allocation3] sm:$0xff] %v692
        %701 = vst [vmem:[#allocation3 + $0x8] sm:$0xff] %v693
        %702 = vst [vmem:[#allocation3 + $0x10] sm:$0xff] %v694
        %703 = vst [vmem:[#allocation3 + $0x18] sm:$0xff] %v695
        %704 = vst [vmem:[#allocation3 + $0x20] sm:$0xff] %v696
        %705 = vst [vmem:[#allocation3 + $0x28] sm:$0xff] %v697
        %706 = vst [vmem:[#allocation3 + $0x30] sm:$0xff] %v698
        %707 = vst [vmem:[#allocation3 + $0x38] sm:$0xff] %v699
        // Predicated region
        $region105: #{tpu_custom_call.1} parent=27 // pred_check
          %p708 = pneg %p153
        $region106: #{tpu_custom_call.1} parent=27 // pred_check_branch
          %710 = sbr.rel (%p708) target = $region108
        $region107: #{tpu_custom_call.1} parent=27 // pred_region
          %711 = vst [vmem:[#allocation6] sm:$0xff] %v614
          %712 = vst [vmem:[#allocation6 + $0x8] sm:$0xff] %v617
          %713 = vst [vmem:[#allocation6 + $0x10] sm:$0xff] %v622
          %714 = vst [vmem:[#allocation6 + $0x18] sm:$0xff] %v625
          %715 = vst [vmem:[#allocation6 + $0x20] sm:$0xff] %v630
          %716 = vst [vmem:[#allocation6 + $0x28] sm:$0xff] %v633
          %717 = vst [vmem:[#allocation6 + $0x30] sm:$0xff] %v638
          %718 = vst [vmem:[#allocation6 + $0x38] sm:$0xff] %v641
          %719 = vst [vmem:[#allocation6 + $0x40] sm:$0xff] %v646
          %720 = vst [vmem:[#allocation6 + $0x48] sm:$0xff] %v649
          %721 = vst [vmem:[#allocation6 + $0x50] sm:$0xff] %v654
          %722 = vst [vmem:[#allocation6 + $0x58] sm:$0xff] %v657
          %723 = vst [vmem:[#allocation6 + $0x60] sm:$0xff] %v662
          %724 = vst [vmem:[#allocation6 + $0x68] sm:$0xff] %v665
          %725 = vst [vmem:[#allocation6 + $0x70] sm:$0xff] %v670
          %726 = vst [vmem:[#allocation6 + $0x78] sm:$0xff] %v673
        $region108: #{tpu_custom_call.1} parent=27 // pred_fallthru
          _
        // Predicated region
        $region109: #{tpu_custom_call.1} parent=27 // pred_check
          %p727 = pneg %p81
        $region110: #{tpu_custom_call.1} parent=27 // pred_check_branch
          %729 = sbr.rel (%p727) target = $region112
        $region111: #{tpu_custom_call.1} parent=27 // pred_region
          %s731 = ssub.s32 2048, 2048
          %732 = vsyncadd [#allocation7], %s731
          %s733 = sshll.u32 [#allocation6], 4
          %s734 = int_to_ptr.vmem [resolvable:$true] %s733
          %739 = dma.vmem_to_hbm [thread:$0]  %s734, 2048, %s4, [#allocation7], 128, 128, 8
        $region112: #{tpu_custom_call.1} parent=27 // pred_fallthru
          _
        // Predicated region
        $region113: #{tpu_custom_call.1} parent=27 // pred_check
          %p740 = pneg %p81
        $region114: #{tpu_custom_call.1} parent=27 // pred_check_branch
          %742 = sbr.rel (%p740) target = $region116
        $region115: #{tpu_custom_call.1} parent=27 // pred_region
          %743 = dma.done [#allocation7], 2048
        $region116: #{tpu_custom_call.1} parent=27 // pred_fallthru
          _
      $region28: #{tpu_custom_call.1} parent=5 // pred_fallthru
        _
      %p744 = scmp.le.s32.totalorder 2, %s11
      // Predicated region
      $region117: #{tpu_custom_call.1} parent=5 // pred_check
        %p745 = pneg %p744
      $region118: #{tpu_custom_call.1} parent=5 // pred_check_branch
        %747 = sbr.rel (%p745) target = $region120
      $region119: #{tpu_custom_call.1} parent=5 // pred_region
        %s748 = ssub.s32 %s11, 2
      $region120: #{tpu_custom_call.1} parent=5 // pred_fallthru
        _
    $region6: #{tpu_custom_call.1} parent=1 // loop_footer
      %s15 = sadd.s32 1, %s11
    $region7: #{tpu_custom_call.1} parent=1 // loop_footer_branch
      %10 = sbr.rel target = $region3
    $region8: #{tpu_custom_call.1} parent=1 // loop_exit
      _
    %749 = vsyncpa [#allocation7], 1
    %s750 = scalar_lea.sflag [#allocation7], 1
    %751 = vsyncpa %s750, 1
  %752 = vsyncmov [#allocation5]
  %s753 = vpop.sfrf %752
  %p754 = scmp.eq.s32.totalorder %s753, 0
  %p755 = pneg %p754
  %757 = shalt.err (%p755)
  %s758 = scalar_lea.sflag [#allocation5], 1
  %759 = vsyncmov %s758
  %s760 = vpop.sfrf %759
  %p761 = scmp.eq.s32.totalorder %s760, 0
  %p762 = pneg %p761
  %764 = shalt.err (%p762)

</llo_original>
